<compile_context>
chip_gen: v7x
topology: tpu7x:2x2x1
jax: 0.10.0
libtpu: 0.0.40
codegen_flags: <defaults>
</compile_context>

<pallas_src>
import numpy as np
import jax
import jax.numpy as jnp
from jax.experimental import pallas as pl
from jax.experimental.pallas import tpu as pltpu

_LANE = 128


def _round_up(v, m):
    return -(-v // m) * m


# ----------------------------------------------------------------------------
# Kernel 1: 3x3 conv (stride 1, pad 1 outside) + ReLU, single im2col matmul
# ----------------------------------------------------------------------------
def _conv3x3_relu_kernel(x_ref, w_ref, b_ref, o_ref):
    # x_ref: (1, H+2, W+2, Cp)   w_ref: (9*Cp, Cout)   b_ref: (1, Cout)
    # o_ref: (1, H, W, Cout)
    _, H, W, Cout = o_ref.shape
    Cp = x_ref.shape[3]
    cols = []
    for dy in range(3):
        for dx in range(3):
            cols.append(x_ref[0, dy:dy + H, dx:dx + W, :].reshape(H * W, Cp))
    patches = jnp.concatenate(cols, axis=1)            # (H*W, 9*Cp), 128-aligned
    acc = jnp.dot(patches, w_ref[...], preferred_element_type=jnp.float32)
    acc = jnp.maximum(acc + b_ref[...], 0.0)
    o_ref[0] = acc.reshape(H, W, Cout)


def conv3x3_relu(x_nhwc, cin, w_padded, b):
    N, H, W, c = x_nhwc.shape
    assert c == cin
    cp = w_padded.shape[0] // 9
    cout = w_padded.shape[1]
    # 1-px spatial halo + channel lane-pad materialized once in XLA (tiny here).
    xp = jnp.pad(x_nhwc, ((0, 0), (1, 1), (1, 1), (0, cp - cin)))
    return pl.pallas_call(
        _conv3x3_relu_kernel,
        out_shape=jax.ShapeDtypeStruct((N, H, W, cout), jnp.float32),
        grid=(N,),
        in_specs=[
            pl.BlockSpec((1, H + 2, W + 2, cp), lambda n: (n, 0, 0, 0)),
            pl.BlockSpec((9 * cp, cout), lambda n: (0, 0)),
            pl.BlockSpec((1, cout), lambda n: (0, 0)),
        ],
        out_specs=pl.BlockSpec((1, H, W, cout), lambda n: (n, 0, 0, 0)),
        compiler_params=pltpu.CompilerParams(
            dimension_semantics=("parallel",)),
    )(xp, w_padded, b)


# ----------------------------------------------------------------------------
# Sobel helper (shared by the min/max kernel and the fused SSIM kernel)
# ----------------------------------------------------------------------------
_SOBEL_X = ((-1., 0., 1.), (-2., 0., 2.), (-1., 0., 1.))
_SOBEL_Y = ((-1., -2., -1.), (0., 0., 0.), (1., 2., 1.))


def _sobel_from_ref(x_ref):
    # x_ref: (1, H+2, W+2) block ref -> (H, W) edge magnitude
    _, Hp, Wp = x_ref.shape
    H, W = Hp - 2, Wp - 2
    ex = jnp.zeros((H, W), jnp.float32)
    ey = jnp.zeros((H, W), jnp.float32)
    for dy in range(3):
        for dx in range(3):
            cx, cy = _SOBEL_X[dy][dx], _SOBEL_Y[dy][dx]
            if cx == 0.0 and cy == 0.0:
                continue
            p = x_ref[0, dy:dy + H, dx:dx + W]
            if cx != 0.0:
                ex = ex + cx * p
            if cy != 0.0:
                ey = ey + cy * p
    return jnp.sqrt(ex * ex + ey * ey + 1e-6)


def _pad_slabs(img_nchw):
    N, C, H, W = img_nchw.shape
    x = img_nchw.reshape(N * C, H, W)
    return jnp.pad(x, ((0, 0), (1, 1), (1, 1)))


# ----------------------------------------------------------------------------
# Kernel 2: global Sobel-edge min/max for BOTH images in one pass (no edge
# maps written to HBM)
# ----------------------------------------------------------------------------
def _sobel_minmax_kernel(x1_ref, x2_ref, mn1_ref, mx1_ref, mn2_ref, mx2_ref):
    @pl.when(pl.program_id(0) == 0)
    def _():
        mn1_ref[...] = jnp.full_like(mn1_ref, jnp.inf)
        mx1_ref[...] = jnp.full_like(mx1_ref, -jnp.inf)
        mn2_ref[...] = jnp.full_like(mn2_ref, jnp.inf)
        mx2_ref[...] = jnp.full_like(mx2_ref, -jnp.inf)

    def upd(e, mn_ref, mx_ref):
        e_mn = jnp.min(jnp.min(e, axis=1, keepdims=True), axis=0, keepdims=True)
        e_mx = jnp.max(jnp.max(e, axis=1, keepdims=True), axis=0, keepdims=True)
        mn_ref[...] = jnp.minimum(mn_ref[...], e_mn)
        mx_ref[...] = jnp.maximum(mx_ref[...], e_mx)

    upd(_sobel_from_ref(x1_ref), mn1_ref, mx1_ref)
    upd(_sobel_from_ref(x2_ref), mn2_ref, mx2_ref)


def sobel_minmax(xp1, xp2):
    NC, Hp, Wp = xp1.shape
    outs = pl.pallas_call(
        _sobel_minmax_kernel,
        out_shape=tuple(jax.ShapeDtypeStruct((1, 1), jnp.float32)
                        for _ in range(4)),
        grid=(NC,),
        in_specs=[pl.BlockSpec((1, Hp, Wp), lambda i: (i, 0, 0)),
                  pl.BlockSpec((1, Hp, Wp), lambda i: (i, 0, 0))],
        out_specs=tuple(pl.BlockSpec((1, 1), lambda i: (0, 0))
                        for _ in range(4)),
        compiler_params=pltpu.CompilerParams(
            dimension_semantics=("arbitrary",)),
    )(xp1, xp2)
    mn1, mx1, mn2, mx2 = outs
    return mn1[0, 0], mx1[0, 0], mn2[0, 0], mx2[0, 0]


# ----------------------------------------------------------------------------
# Kernel 3: fused Sobel + normalize + SSIM (11x11 Gaussian, sigma=1.5, valid
# windows, data_range=1).  Blur = two small MXU matmuls per map.
# ----------------------------------------------------------------------------
def _gaussian_1d(size=11, sigma=1.5):
    xs = np.arange(size, dtype=np.float64) - (size - 1) / 2.0
    g = np.exp(-(xs ** 2) / (2.0 * sigma ** 2))
    return (g / g.sum()).astype(np.float32)


def _blur_matrices(H, W, size=11):
    g = _gaussian_1d(size)
    Ho, Wo = H - size + 1, W - size + 1
    bh = np.zeros((Ho, H), np.float32)
    for i in range(Ho):
        bh[i, i:i + size] = g
    bwt = np.zeros((W, Wo), np.float32)
    for j in range(Wo):
        bwt[j:j + size, j] = g
    return jnp.asarray(bh), jnp.asarray(bwt), Ho, Wo


def _ssim_sobel_kernel(p_ref, bh_ref, bwt_ref, x1_ref, x2_ref, o_ref):
    # p_ref (SMEM, (4,)): [min1, 1/range1, min2, 1/range2]
    # bh_ref: (Ho, H)  bwt_ref: (W, Wo)  x*_ref: (1, H+2, W+2)  o_ref: (1, 1)
    @pl.when(pl.program_id(0) == 0)
    def _():
        o_ref[...] = jnp.zeros_like(o_ref)

    x = (_sobel_from_ref(x1_ref) - p_ref[0]) * p_ref[1]
    y = (_sobel_from_ref(x2_ref) - p_ref[2]) * p_ref[3]
    bh = bh_ref[...]
    bwt = bwt_ref[...]

    def blur(a):
        t = jnp.dot(bh, a, preferred_element_type=jnp.float32)      # (Ho, W)
        return jnp.dot(t, bwt, preferred_element_type=jnp.float32)  # (Ho, Wo)

    mu1 = blur(x)
    mu2 = blur(y)
    mu1mu2 = mu1 * mu2
    mu1sq = mu1 * mu1
    mu2sq = mu2 * mu2
    sigma12 = blur(x * y) - mu1mu2
    sigma1 = blur(x * x) - mu1sq
    sigma2 = blur(y * y) - mu2sq
    c1 = 0.01 ** 2
    c2 = 0.03 ** 2
    num = (2.0 * mu1mu2 + c1) * (2.0 * sigma12 + c2)
    den = (mu1sq + mu2sq + c1) * (sigma1 + sigma2 + c2)
    smap = num / den
    o_ref[...] = o_ref[...] + jnp.sum(
        jnp.sum(smap, axis=1, keepdims=True), axis=0, keepdims=True)


def ssim_fused(xp1, xp2, mn1, mx1, mn2, mx2, win=11):
    NC, Hp, Wp = xp1.shape
    H, W = Hp - 2, Wp - 2
    bh, bwt, Ho, Wo = _blur_matrices(H, W, win)
    p = jnp.stack([mn1, 1.0 / (mx1 - mn1 + 1e-6),
                   mn2, 1.0 / (mx2 - mn2 + 1e-6)]).astype(jnp.float32)
    total = pl.pallas_call(
        _ssim_sobel_kernel,
        out_shape=jax.ShapeDtypeStruct((1, 1), jnp.float32),
        grid=(NC,),
        in_specs=[pl.BlockSpec(memory_space=pltpu.MemorySpace.SMEM),
                  pl.BlockSpec((Ho, H), lambda i: (0, 0)),
                  pl.BlockSpec((W, Wo), lambda i: (0, 0)),
                  pl.BlockSpec((1, Hp, Wp), lambda i: (i, 0, 0)),
                  pl.BlockSpec((1, Hp, Wp), lambda i: (i, 0, 0))],
        out_specs=pl.BlockSpec((1, 1), lambda i: (0, 0)),
        compiler_params=pltpu.CompilerParams(
            dimension_semantics=("arbitrary",)),
    )(p, bh, bwt, xp1, xp2)
    return total[0, 0] / (NC * Ho * Wo)


# ----------------------------------------------------------------------------
# Kernel 4: style statistics loss (per-(N,C) mean / unbiased std over H*W)
# computed directly in NHWC; one call per pyramid level
# ----------------------------------------------------------------------------
def _stats_nhwc(x, hw):
    m = jnp.sum(jnp.sum(x, axis=0, keepdims=True),
                axis=1, keepdims=True) / hw                       # (1,1,C)
    v = jnp.sum(jnp.sum((x - m) ** 2, axis=0, keepdims=True),
                axis=1, keepdims=True) / (hw - 1)                 # unbiased
    return m, jnp.sqrt(v + 1e-5)


def _style_stats_kernel(g_ref, s_ref, o_ref):
    @pl.when(pl.program_id(0) == 0)
    def _():
        o_ref[...] = jnp.zeros_like(o_ref)
    _, H, W, C = g_ref.shape
    hw = H * W
    gm, gs = _stats_nhwc(g_ref[0], hw)
    sm, ss = _stats_nhwc(s_ref[0], hw)
    d = (gm - sm) ** 2 + (gs - ss) ** 2                           # (1,1,C)
    o_ref[...] = o_ref[...] + jnp.sum(d, axis=2, keepdims=True).reshape(1, 1)


def calc_style_loss(gen_feat, style_feat):
    N, H, W, C = gen_feat.shape
    out = pl.pallas_call(
        _style_stats_kernel,
        out_shape=jax.ShapeDtypeStruct((1, 1), jnp.float32),
        grid=(N,),
        in_specs=[pl.BlockSpec((1, H, W, C), lambda n: (n, 0, 0, 0)),
                  pl.BlockSpec((1, H, W, C), lambda n: (n, 0, 0, 0))],
        out_specs=pl.BlockSpec((1, 1), lambda n: (0, 0)),
        compiler_params=pltpu.CompilerParams(
            dimension_semantics=("arbitrary",)),
    )(gen_feat, style_feat)
    return out[0, 0] / (N * C)


# ----------------------------------------------------------------------------
# Kernel 5: last pyramid level -- style statistics loss + content MSE fused
# (same blocks, same grid, one pallas_call instead of two)
# ----------------------------------------------------------------------------
def _style_content_kernel(g_ref, s_ref, c_ref, style_ref, sse_ref):
    @pl.when(pl.program_id(0) == 0)
    def _():
        style_ref[...] = jnp.zeros_like(style_ref)
        sse_ref[...] = jnp.zeros_like(sse_ref)
    _, H, W, C = g_ref.shape
    hw = H * W
    g = g_ref[0]

    gm, gs = _stats_nhwc(g, hw)
    sm, ss = _stats_nhwc(s_ref[0], hw)
    d = (gm - sm) ** 2 + (gs - ss) ** 2                           # (1,1,C)
    style_ref[...] = style_ref[...] + jnp.sum(
        d, axis=2, keepdims=True).reshape(1, 1)

    dc = g - c_ref[0]
    sq = dc * dc
    ssum = jnp.sum(jnp.sum(sq, axis=0, keepdims=True),
                   axis=1, keepdims=True)                          # (1,1,C)
    sse_ref[...] = sse_ref[...] + jnp.sum(
        ssum, axis=2, keepdims=True).reshape(1, 1)


def calc_style_and_content_loss(gen_feat, style_feat, content_feat):
    N, H, W, C = gen_feat.shape
    style_sum, sse = pl.pallas_call(
        _style_content_kernel,
        out_shape=(jax.ShapeDtypeStruct((1, 1), jnp.float32),
                   jax.ShapeDtypeStruct((1, 1), jnp.float32)),
        grid=(N,),
        in_specs=[pl.BlockSpec((1, H, W, C), lambda n: (n, 0, 0, 0)),
                  pl.BlockSpec((1, H, W, C), lambda n: (n, 0, 0, 0)),
                  pl.BlockSpec((1, H, W, C), lambda n: (n, 0, 0, 0))],
        out_specs=(pl.BlockSpec((1, 1), lambda n: (0, 0)),
                   pl.BlockSpec((1, 1), lambda n: (0, 0))),
        compiler_params=pltpu.CompilerParams(
            dimension_semantics=("arbitrary",)),
    )(gen_feat, style_feat, content_feat)
    style_loss = style_sum[0, 0] / (N * C)
    content_loss = sse[0, 0] / (N * H * W * C)
    return style_loss, content_loss


# ----------------------------------------------------------------------------
# Synthetic VGG-style encoder (stand-in for the external vgg_encoder module)
# ----------------------------------------------------------------------------
def init_encoder_params(key, channels=((3, 128), (128, 128), (128, 256))):
    params = []
    for i, (cin, cout) in enumerate(channels):
        kw, kb = jax.random.split(jax.random.fold_in(key, i))
        std = (2.0 / (9 * cin)) ** 0.5
        w = jax.random.normal(kw, (9, cin, cout), jnp.float32) * std
        cp = _round_up(cin, _LANE)
        # zero-pad Cin to the lane-padded width and flatten to (9*Cp, Cout)
        wp = jnp.pad(w, ((0, 0), (0, cp - cin), (0, 0))).reshape(9 * cp, cout)
        b = jax.random.normal(kb, (1, cout), jnp.float32) * 0.01
        params.append((cin, wp, b))
    return params


def avg_pool2x2(x):
    N, H, W, C = x.shape
    return x.reshape(N, H // 2, 2, W // 2, 2, C).mean(axis=(2, 4))


def vgg_encoder(x_nhwc, params):
    feats = []
    h = x_nhwc
    for i, (cin, w, b) in enumerate(params):
        h = conv3x3_relu(h, cin, w, b)
        feats.append(h)
        if i < len(params) - 1:
            h = avg_pool2x2(h)
    return feats


# ----------------------------------------------------------------------------
# StyleTransferLoss
# ----------------------------------------------------------------------------
class StyleTransferLoss:
    def __init__(self, encoder_params, lambda_c=1.0, lambda_s=4.0, lambda_ssim=7.0):
        self.params = encoder_params
        self.lambda_c = float(lambda_c)
        self.lambda_s = float(lambda_s)
        self.lambda_ssim = float(lambda_ssim)

    def __call__(self, generated_image, content, content_feats, style_feats):
        # generated_image / content: NCHW (PyTorch convention)
        gen_nhwc = jnp.transpose(generated_image, (0, 2, 3, 1))
        gen_feats = vgg_encoder(gen_nhwc, self.params)

        # style loss on all levels; content MSE fused into the last level.
        style_loss = jnp.float32(0.0)
        for gf, sf in zip(gen_feats[:-1], style_feats[:-1]):
            style_loss = style_loss + calc_style_loss(gf, sf)
        last_style, content_loss = calc_style_and_content_loss(
            gen_feats[-1], style_feats[-1], content_feats[-1])
        style_loss = style_loss + last_style

        # Sobel edges: pass 1 = global min/max for both images, pass 2 = SSIM
        # with Sobel + normalization fused in (edge maps never hit HBM).
        xp_g = _pad_slabs(generated_image)
        xp_c = _pad_slabs(content)
        mn_g, mx_g, mn_c, mx_c = sobel_minmax(xp_g, xp_c)
        edge_loss = 1.0 - ssim_fused(xp_g, xp_c, mn_g, mx_g, mn_c, mx_c)

        total = (self.lambda_c * content_loss
                 + self.lambda_s * style_loss
                 + self.lambda_ssim * edge_loss)
        return total, self.lambda_ssim * edge_loss, self.lambda_s * style_loss


if __name__ == "__main__":
    key = jax.random.PRNGKey(0)
    k1, k2, k3, kp = jax.random.split(key, 4)
    N, C, H, W = 2, 3, 16, 16

    generated = jax.random.uniform(k1, (N, C, H, W), jnp.float32)
    content = jax.random.uniform(k2, (N, C, H, W), jnp.float32)
    style = jax.random.uniform(k3, (N, C, H, W), jnp.float32)

    params = init_encoder_params(kp)
    loss_mod = StyleTransferLoss(params, lambda_c=1, lambda_s=4, lambda_ssim=7)

    # precomputed feature pyramids (NHWC) for content / style, as in real usage
    content_feats = vgg_encoder(jnp.transpose(content, (0, 2, 3, 1)), params)
    style_feats = vgg_encoder(jnp.transpose(style, (0, 2, 3, 1)), params)

    @jax.jit
    def run(gen, cont, c_feats, s_feats):
        return loss_mod(gen, cont, c_feats, s_feats)

    total, edge_term, style_term = run(generated, content,
                                       content_feats, style_feats)
    jax.block_until_ready((total, edge_term, style_term))
    print("KERNEL_OK")
</pallas_src>

<mosaic_0001>
module attributes {stable_mosaic.version = 11 : i64} {
  func.func @_conv3x3_relu_kernel(%arg0: i32, %arg1: memref<1x18x18x128xf32, #tpu.memory_space<vmem>>, %arg2: memref<1152x128xf32, #tpu.memory_space<vmem>>, %arg3: memref<1x128xf32, #tpu.memory_space<vmem>>, %arg4: memref<1x16x16x128xf32, #tpu.memory_space<vmem>>) attributes {dimension_semantics = [#tpu.dimension_semantics<parallel>], iteration_bounds = array<i64: 2>, scalar_prefetch = 0 : i64, scratch_operands = 0 : i64, tpu.core_type = #tpu.core_type<tc>, window_params = [{transform_indices = @transform_0, window_bounds = array<i64: 1, 18, 18, 128>}, {pipeline_mode = #tpu.pipeline_mode<synchronous>, transform_indices = @transform_1, window_bounds = array<i64: 1152, 128>}, {pipeline_mode = #tpu.pipeline_mode<synchronous>, transform_indices = @transform_2, window_bounds = array<i64: 1, 128>}, {transform_indices = @transform_3, window_bounds = array<i64: 1, 16, 16, 128>}]} {
    %c0 = arith.constant 0 : index
    %c0_0 = arith.constant 0 : index
    %c0_1 = arith.constant 0 : index
    %c0_2 = arith.constant 0 : index
    %0 = vector.load %arg1[%c0, %c0_0, %c0_1, %c0_2] : memref<1x18x18x128xf32, #tpu.memory_space<vmem>>, vector<1x16x16x128xf32>
    %1 = vector.shape_cast %0 : vector<1x16x16x128xf32> to vector<16x16x128xf32>
    %2 = vector.shape_cast %1 : vector<16x16x128xf32> to vector<256x128xf32>
    %c0_3 = arith.constant 0 : index
    %c0_4 = arith.constant 0 : index
    %c1 = arith.constant 1 : index
    %c0_5 = arith.constant 0 : index
    %3 = vector.load %arg1[%c0_3, %c0_4, %c1, %c0_5] : memref<1x18x18x128xf32, #tpu.memory_space<vmem>>, vector<1x16x16x128xf32>
    %4 = vector.shape_cast %3 : vector<1x16x16x128xf32> to vector<16x16x128xf32>
    %5 = vector.shape_cast %4 : vector<16x16x128xf32> to vector<256x128xf32>
    %c0_6 = arith.constant 0 : index
    %c0_7 = arith.constant 0 : index
    %c2 = arith.constant 2 : index
    %c0_8 = arith.constant 0 : index
    %6 = vector.load %arg1[%c0_6, %c0_7, %c2, %c0_8] : memref<1x18x18x128xf32, #tpu.memory_space<vmem>>, vector<1x16x16x128xf32>
    %7 = vector.shape_cast %6 : vector<1x16x16x128xf32> to vector<16x16x128xf32>
    %8 = vector.shape_cast %7 : vector<16x16x128xf32> to vector<256x128xf32>
    %c0_9 = arith.constant 0 : index
    %c1_10 = arith.constant 1 : index
    %c0_11 = arith.constant 0 : index
    %c0_12 = arith.constant 0 : index
    %9 = vector.load %arg1[%c0_9, %c1_10, %c0_11, %c0_12] : memref<1x18x18x128xf32, #tpu.memory_space<vmem>>, vector<1x16x16x128xf32>
    %10 = vector.shape_cast %9 : vector<1x16x16x128xf32> to vector<16x16x128xf32>
    %11 = vector.shape_cast %10 : vector<16x16x128xf32> to vector<256x128xf32>
    %c0_13 = arith.constant 0 : index
    %c1_14 = arith.constant 1 : index
    %c1_15 = arith.constant 1 : index
    %c0_16 = arith.constant 0 : index
    %12 = vector.load %arg1[%c0_13, %c1_14, %c1_15, %c0_16] : memref<1x18x18x128xf32, #tpu.memory_space<vmem>>, vector<1x16x16x128xf32>
    %13 = vector.shape_cast %12 : vector<1x16x16x128xf32> to vector<16x16x128xf32>
    %14 = vector.shape_cast %13 : vector<16x16x128xf32> to vector<256x128xf32>
    %c0_17 = arith.constant 0 : index
    %c1_18 = arith.constant 1 : index
    %c2_19 = arith.constant 2 : index
    %c0_20 = arith.constant 0 : index
    %15 = vector.load %arg1[%c0_17, %c1_18, %c2_19, %c0_20] : memref<1x18x18x128xf32, #tpu.memory_space<vmem>>, vector<1x16x16x128xf32>
    %16 = vector.shape_cast %15 : vector<1x16x16x128xf32> to vector<16x16x128xf32>
    %17 = vector.shape_cast %16 : vector<16x16x128xf32> to vector<256x128xf32>
    %c0_21 = arith.constant 0 : index
    %c2_22 = arith.constant 2 : index
    %c0_23 = arith.constant 0 : index
    %c0_24 = arith.constant 0 : index
    %18 = vector.load %arg1[%c0_21, %c2_22, %c0_23, %c0_24] : memref<1x18x18x128xf32, #tpu.memory_space<vmem>>, vector<1x16x16x128xf32>
    %19 = vector.shape_cast %18 : vector<1x16x16x128xf32> to vector<16x16x128xf32>
    %20 = vector.shape_cast %19 : vector<16x16x128xf32> to vector<256x128xf32>
    %c0_25 = arith.constant 0 : index
    %c2_26 = arith.constant 2 : index
    %c1_27 = arith.constant 1 : index
    %c0_28 = arith.constant 0 : index
    %21 = vector.load %arg1[%c0_25, %c2_26, %c1_27, %c0_28] : memref<1x18x18x128xf32, #tpu.memory_space<vmem>>, vector<1x16x16x128xf32>
    %22 = vector.shape_cast %21 : vector<1x16x16x128xf32> to vector<16x16x128xf32>
    %23 = vector.shape_cast %22 : vector<16x16x128xf32> to vector<256x128xf32>
    %c0_29 = arith.constant 0 : index
    %c2_30 = arith.constant 2 : index
    %c2_31 = arith.constant 2 : index
    %c0_32 = arith.constant 0 : index
    %24 = vector.load %arg1[%c0_29, %c2_30, %c2_31, %c0_32] : memref<1x18x18x128xf32, #tpu.memory_space<vmem>>, vector<1x16x16x128xf32>
    %25 = vector.shape_cast %24 : vector<1x16x16x128xf32> to vector<16x16x128xf32>
    %26 = vector.shape_cast %25 : vector<16x16x128xf32> to vector<256x128xf32>
    %27 = tpu.concatenate %2, %5, %8, %11, %14, %17, %20, %23, %26 in 1 : vector<256x128xf32>, vector<256x128xf32>, vector<256x128xf32>, vector<256x128xf32>, vector<256x128xf32>, vector<256x128xf32>, vector<256x128xf32>, vector<256x128xf32>, vector<256x128xf32> -> vector<256x1152xf32>
    %c0_33 = arith.constant 0 : index
    %c0_34 = arith.constant 0 : index
    %28 = vector.load %arg2[%c0_33, %c0_34] : memref<1152x128xf32, #tpu.memory_space<vmem>>, vector<1152x128xf32>
    %cst = arith.constant dense<0.000000e+00> : vector<256x128xf32>
    %29 = tpu.matmul %27, %28, %cst {dimension_numbers = #tpu.dot_dimension_numbers<[1], [0], [0], [1], [0, 0, 1, 1], [], []>} : vector<256x1152xf32>, vector<1152x128xf32>, vector<256x128xf32> -> vector<256x128xf32>
    %c0_35 = arith.constant 0 : index
    %c0_36 = arith.constant 0 : index
    %30 = vector.load %arg3[%c0_35, %c0_36] : memref<1x128xf32, #tpu.memory_space<vmem>>, vector<1x128xf32>
    %31 = vector.broadcast %30 : vector<1x128xf32> to vector<256x128xf32>
    %32 = arith.addf %29, %31 : vector<256x128xf32>
    %cst_37 = arith.constant 0.000000e+00 : f32
    %33 = vector.broadcast %cst_37 : f32 to vector<256x128xf32>
    %34 = arith.maximumf %32, %33 : vector<256x128xf32>
    %35 = vector.shape_cast %34 : vector<256x128xf32> to vector<16x16x128xf32>
    %c0_38 = arith.constant 0 : index
    %c0_39 = arith.constant 0 : index
    %c0_40 = arith.constant 0 : index
    %c0_41 = arith.constant 0 : index
    %36 = vector.load %arg4[%c0_38, %c0_39, %c0_40, %c0_41] : memref<1x16x16x128xf32, #tpu.memory_space<vmem>>, vector<1x16x16x128xf32>
    %37 = vector.shape_cast %36 : vector<1x16x16x128xf32> to vector<16x16x128xf32>
    %38 = vector.shape_cast %35 : vector<16x16x128xf32> to vector<1x16x16x128xf32>
    tpu.vector_store %arg4[%c0_38, %c0_39, %c0_40, %c0_41], %38 {strides = array<i32>} : memref<1x16x16x128xf32, #tpu.memory_space<vmem>>, vector<1x16x16x128xf32>,
    return
  }
  func.func @transform_0(%arg0: i32) -> (i32, i32, i32, i32) {
    %c0_i32 = arith.constant 0 : i32
    %c0_i32_0 = arith.constant 0 : i32
    %c0_i32_1 = arith.constant 0 : i32
    %c0_i32_2 = arith.constant 0 : i32
    return %arg0, %c0_i32, %c0_i32_0, %c0_i32_1 : i32, i32, i32, i32
  }
  func.func @transform_1(%arg0: i32) -> (i32, i32) {
    %c0_i32 = arith.constant 0 : i32
    %c0_i32_0 = arith.constant 0 : i32
    %c0_i32_1 = arith.constant 0 : i32
    return %c0_i32, %c0_i32_0 : i32, i32
  }
  func.func @transform_2(%arg0: i32) -> (i32, i32) {
    %c0_i32 = arith.constant 0 : i32
    %c0_i32_0 = arith.constant 0 : i32
    %c0_i32_1 = arith.constant 0 : i32
    return %c0_i32, %c0_i32_0 : i32, i32
  }
  func.func @transform_3(%arg0: i32) -> (i32, i32, i32, i32) {
    %c0_i32 = arith.constant 0 : i32
    %c0_i32_0 = arith.constant 0 : i32
    %c0_i32_1 = arith.constant 0 : i32
    %c0_i32_2 = arith.constant 0 : i32
    return %arg0, %c0_i32, %c0_i32_0, %c0_i32_1 : i32, i32, i32, i32
  }
}

</mosaic_0001>

<llo_original>
// kernel: tpu_custom_call.1
$region0: #{tpu_custom_call.1}
  #allocation0 [shape = 'u32[]', space=smem, size = 0x4, offset = 0x4, fixed_abs, tag = 'smem constant byte address 0x4 - core index']
  #allocation1 [shape = 'u32[144,128]{1,0:T(1,128)}', space=vmem, size = 0x12000, scoped, tag = 'internal scratch']
  %s0 = inlined_call_operand.vmem [shape: f32[2,18,18,128], index: 0, kind: input, shape index: {}]
  %s1 = inlined_call_operand.vmem [shape: f32[1152,128], index: 1, kind: input, shape index: {}]
  %s2 = inlined_call_operand.vmem [shape: f32[1,128], index: 2, kind: input, shape index: {}]
  %s3 = inlined_call_operand.hbm [shape: f32[2,16,16,128], index: 3, kind: output, shape index: {}]
  %s4 = sld [smem:[#allocation0]]
  $region45: #{tpu_custom_call.1} parent=0
    _
  %s6 = ssub.s32 1, %s4
  %s7 = scalar_select 0, %s6, %s4
  $region1: #{tpu_custom_call.1} parent=0
    #allocation2 [shape = 'u8[262144]{0}', space=vmem, size = 0x40000, scoped, tag = 'output window, operand 0']
    #allocation3 [shape = 's32[2]{0}', space=sflag, size = 0x8, scoped, tag = 'scoped memory for tpu_custom_call.1']
    %8 = vsyncpa [#allocation3], 0
    %s9 = scalar_lea.sflag [#allocation3], 1
    %10 = vsyncpa %s9, 0
    loop: start=0, step=1, limit=4
    $region2: #{tpu_custom_call.1} parent=1 // loop_pre_header
      _
    $region3: #{tpu_custom_call.1} parent=1 // loop_header
      %s12 = sphi 0, %s16
      %p13 = scmp.ge.s32.totalorder %s12, 4
      %s22 = sphi 0, %s24
      %s25 = sphi 0, %s22
      %s26 = sphi 0, %s25
      %s42 = sphi 0, %s26
      %s46 = sphi 0, %s46
      %s48 = sphi 0, %s46
      %s49 = sphi 0, %s48
      %s63 = sphi 0, %s49
      %s67 = sphi 0, %s67
      %s69 = sphi 0, %s67
      %s70 = sphi 0, %s69
      %s84 = sphi 0, %s70
      %s90 = sphi 0, %s92
      %s93 = sphi 0, %s90
      %s94 = sphi 0, %s93
      %s110 = sphi 0, %s94
    $region4: #{tpu_custom_call.1} parent=1 // loop_header_branch
      %15 = sbr.rel (%p13) target = $region8
    $region5: #{tpu_custom_call.1} parent=1 // loop_body
      %s17 = ssub.s32 %s12, 1
      %s18 = ssub.s32 %s12, 2
      %s19 = sadd.s32 %s12, 1
      %s20 = ssub.s32 %s12, %s19
      %p21 = scmp.eq.s32.totalorder %s20, 0
      %s23 = sadd.s32 %s22, 1
      %s24 = scalar_select %p21, %s22, %s23
      %p27 = pneg %p21
      %p28 = scmp.eq.s32.totalorder %s12, 1
      %p29 = por %p27, %p28
      %p30 = scmp.ne.s32.totalorder %s22, %s25
      %p31 = scmp.eq.s32.totalorder %s12, 0
      %p32 = por %p30, %p31
      %p33 = scmp.ne.s32.totalorder %s22, %s25
      %p34 = scmp.eq.s32.totalorder %s17, 1
      %p35 = por %p33, %p34
      %p36 = scmp.ne.s32.totalorder %s25, %s26
      %p37 = scmp.eq.s32.totalorder %s17, 0
      %p38 = por %p36, %p37
      %p39 = scmp.ne.s32.totalorder %s25, %s26
      %p40 = scmp.eq.s32.totalorder %s18, 1
      %p41 = por %p39, %p40
      %p43 = scmp.ne.s32.totalorder %s26, %s42
      %p44 = scmp.eq.s32.totalorder %s18, 0
      %p45 = por %p43, %p44
      %s47 = sadd.s32 %s46, 1
      %p50 = scmp.eq.s32.totalorder %s12, 1
      %p51 = scmp.ne.s32.totalorder %s46, %s48
      %p52 = scmp.eq.s32.totalorder %s12, 0
      %p53 = por %p51, %p52
      %p54 = scmp.ne.s32.totalorder %s46, %s48
      %p55 = scmp.eq.s32.totalorder %s17, 1
      %p56 = por %p54, %p55
      %p57 = scmp.ne.s32.totalorder %s48, %s49
      %p58 = scmp.eq.s32.totalorder %s17, 0
      %p59 = por %p57, %p58
      %p60 = scmp.ne.s32.totalorder %s48, %s49
      %p61 = scmp.eq.s32.totalorder %s18, 1
      %p62 = por %p60, %p61
      %p64 = scmp.ne.s32.totalorder %s49, %s63
      %p65 = scmp.eq.s32.totalorder %s18, 0
      %p66 = por %p64, %p65
      %s68 = sadd.s32 %s67, 1
      %p71 = scmp.eq.s32.totalorder %s12, 1
      %p72 = scmp.ne.s32.totalorder %s67, %s69
      %p73 = scmp.eq.s32.totalorder %s12, 0
      %p74 = por %p72, %p73
      %p75 = scmp.ne.s32.totalorder %s67, %s69
      %p76 = scmp.eq.s32.totalorder %s17, 1
      %p77 = por %p75, %p76
      %p78 = scmp.ne.s32.totalorder %s69, %s70
      %p79 = scmp.eq.s32.totalorder %s17, 0
      %p80 = por %p78, %p79
      %p81 = scmp.ne.s32.totalorder %s69, %s70
      %p82 = scmp.eq.s32.totalorder %s18, 1
      %p83 = por %p81, %p82
      %p85 = scmp.ne.s32.totalorder %s70, %s84
      %p86 = scmp.eq.s32.totalorder %s18, 0
      %p87 = por %p85, %p86
      %s88 = ssub.s32 %s12, %s19
      %p89 = scmp.eq.s32.totalorder %s88, 0
      %s91 = sadd.s32 %s90, 1
      %s92 = scalar_select %p89, %s90, %s91
      %p95 = pneg %p89
      %p96 = scmp.eq.s32.totalorder %s12, 1
      %p97 = por %p95, %p96
      %p98 = scmp.ne.s32.totalorder %s90, %s93
      %p99 = scmp.eq.s32.totalorder %s12, 0
      %p100 = por %p98, %p99
      %p101 = scmp.ne.s32.totalorder %s90, %s93
      %p102 = scmp.eq.s32.totalorder %s17, 1
      %p103 = por %p101, %p102
      %p104 = scmp.ne.s32.totalorder %s93, %s94
      %p105 = scmp.eq.s32.totalorder %s17, 0
      %p106 = por %p104, %p105
      %p107 = scmp.ne.s32.totalorder %s93, %s94
      %p108 = scmp.eq.s32.totalorder %s18, 1
      %p109 = por %p107, %p108
      %p111 = scmp.ne.s32.totalorder %s94, %s110
      %p112 = scmp.eq.s32.totalorder %s18, 0
      %p113 = por %p111, %p112
      %p114 = scmp.le.s32.totalorder 1, %s12
      %p115 = scmp.lt.s32.totalorder %s12, 3
      %p116 = pnand %p114, %p115
      %p117 = pneg %p116
      // Predicated region
      $region9: #{tpu_custom_call.1} parent=5 // pred_check
        _
      $region10: #{tpu_custom_call.1} parent=5 // pred_check_branch
        %119 = sbr.rel (%p116) target = $region12
      $region11: #{tpu_custom_call.1} parent=5 // pred_region
        %s120 = ssub.s32 %s12, 1
        // Predicated region
        $region13: #{tpu_custom_call.1} parent=11 // pred_check
          %p121 = pneg %p59
        $region14: #{tpu_custom_call.1} parent=11 // pred_check_branch
          %123 = sbr.rel (%p121) target = $region16
        $region15: #{tpu_custom_call.1} parent=11 // pred_region
          _
        $region16: #{tpu_custom_call.1} parent=11 // pred_fallthru
          _
        // Predicated region
        $region17: #{tpu_custom_call.1} parent=11 // pred_check
          %p124 = pneg %p80
        $region18: #{tpu_custom_call.1} parent=11 // pred_check_branch
          %126 = sbr.rel (%p124) target = $region20
        $region19: #{tpu_custom_call.1} parent=11 // pred_region
          _
        $region20: #{tpu_custom_call.1} parent=11 // pred_fallthru
          _
      $region12: #{tpu_custom_call.1} parent=5 // pred_fallthru
        _
      %p127 = scmp.lt.s32.totalorder %s12, 2
      // Predicated region
      $region21: #{tpu_custom_call.1} parent=5 // pred_check
        %p128 = pneg %p127
      $region22: #{tpu_custom_call.1} parent=5 // pred_check_branch
        %130 = sbr.rel (%p128) target = $region24
      $region23: #{tpu_custom_call.1} parent=5 // pred_region
        // Predicated region
        $region25: #{tpu_custom_call.1} parent=23 // pred_check
          %p131 = pneg %p32
        $region26: #{tpu_custom_call.1} parent=23 // pred_check_branch
          %133 = sbr.rel (%p131) target = $region28
        $region27: #{tpu_custom_call.1} parent=23 // pred_region
          %p134 = scmp.lt.s32.totalorder %s12, 1
          %s135 = scalar_select %p134, %s12, 1
          %s136 = smul.addr %s135, 54
          %s137 = smul.addr %s136, 8
          %s138 = scalar_lea.vmem %s0, %s137
        $region28: #{tpu_custom_call.1} parent=23 // pred_fallthru
          _
      $region24: #{tpu_custom_call.1} parent=5 // pred_fallthru
        _
      %p139 = scmp.le.s32.totalorder 1, %s12
      %p140 = scmp.lt.s32.totalorder %s12, 3
      %p141 = pnand %p139, %p140
      %p142 = pneg %p141
      // Predicated region
      $region29: #{tpu_custom_call.1} parent=5 // pred_check
        _
      $region30: #{tpu_custom_call.1} parent=5 // pred_check_branch
        %144 = sbr.rel (%p141) target = $region32
      $region31: #{tpu_custom_call.1} parent=5 // pred_region
        %s145 = ssub.s32 %s12, 1
        %p146 = scmp.lt.s32.totalorder %s17, 1
        %s147 = scalar_select %p146, %s17, 1
        %s148 = smul.addr %s147, 54
        %s149 = smul.addr %s148, 8
        %s150 = scalar_lea.vmem %s0, %s149
        %p151 = pneg %p38
        %p152 = pneg %p35
        %p153 = pneg %p59
        %p154 = pneg %p56
        %p155 = pneg %p80
        %p156 = pneg %p77
        %p157 = pneg %p106
        %p158 = pneg %p103
        %s159 = sand.u32 %s93, 1
        %s160 = scalar_lea.sflag [#allocation3], %s159
        %s161 = sand.u32 %s93, 1
        %s162 = smul.addr %s161, 256
        %s163 = scalar_lea.vmem [#allocation2], %s162
        %p164 = scmp.lt.s32.totalorder %s17, 1
        %s165 = scalar_select %p164, %s17, 1
        %s166 = smul.addr %s165, 54
        %s167 = smul.addr %s166, 8
        %s168 = scalar_lea.vmem %s0, %s167
        %v169 = vld [vmem:[%s168] sm:$0xff]
        %v170 = vld [vmem:[%s168 + $0x8] sm:$0xff]
        %v171 = vld [vmem:[%s168 + $0x18] sm:$0xff]
        %v172 = vld [vmem:[%s168 + $0x20] sm:$0xff]
        %v173 = vld [vmem:[%s168 + $0x30] sm:$0xff]
        %v174 = vld [vmem:[%s168 + $0x38] sm:$0xff]
        %v175 = vld [vmem:[%s168 + $0x48] sm:$0xff]
        %v176 = vld [vmem:[%s168 + $0x50] sm:$0xff]
        %v177 = vld [vmem:[%s168 + $0x60] sm:$0xff]
        %v178 = vld [vmem:[%s168 + $0x68] sm:$0xff]
        %v179 = vld [vmem:[%s168 + $0x78] sm:$0xff]
        %v180 = vld [vmem:[%s168 + $0x80] sm:$0xff]
        %v181 = vld [vmem:[%s168 + $0x90] sm:$0xff]
        %v182 = vld [vmem:[%s168 + $0x98] sm:$0xff]
        %v183 = vld [vmem:[%s168 + $0xa8] sm:$0xff]
        %v184 = vld [vmem:[%s168 + $0xb0] sm:$0xff]
        %v185 = vld [vmem:[%s168 + $0xc0] sm:$0xff]
        %v186 = vld [vmem:[%s168 + $0xc8] sm:$0xff]
        %v187 = vld [vmem:[%s168 + $0xd8] sm:$0xff]
        %v188 = vld [vmem:[%s168 + $0xe0] sm:$0xff]
        %v189 = vld [vmem:[%s168 + $0xf0] sm:$0xff]
        %v190 = vld [vmem:[%s168 + $0xf8] sm:$0xff]
        %v191 = vld [vmem:[%s168 + $0x108] sm:$0xff]
        %v192 = vld [vmem:[%s168 + $0x110] sm:$0xff]
        %v193 = vld [vmem:[%s168 + $0x120] sm:$0xff]
        %v194 = vld [vmem:[%s168 + $0x128] sm:$0xff]
        %v195 = vld [vmem:[%s168 + $0x138] sm:$0xff]
        %v196 = vld [vmem:[%s168 + $0x140] sm:$0xff]
        %v197 = vld [vmem:[%s168 + $0x150] sm:$0xff]
        %v198 = vld [vmem:[%s168 + $0x158] sm:$0xff]
        %v199 = vld [vmem:[%s168 + $0x168] sm:$0xff]
        %v200 = vld [vmem:[%s168 + $0x170] sm:$0xff]
        %v201 = vld [vmem:[%s168 + $0x1] sm:$0xff]
        %v202 = vld [vmem:[%s168 + $0x9] sm:$0xff]
        %v203 = vld [vmem:[%s168 + $0x19] sm:$0xff]
        %v204 = vld [vmem:[%s168 + $0x21] sm:$0xff]
        %v205 = vld [vmem:[%s168 + $0x31] sm:$0xff]
        %v206 = vld [vmem:[%s168 + $0x39] sm:$0xff]
        %v207 = vld [vmem:[%s168 + $0x49] sm:$0xff]
        %v208 = vld [vmem:[%s168 + $0x51] sm:$0xff]
        %v209 = vld [vmem:[%s168 + $0x61] sm:$0xff]
        %v210 = vld [vmem:[%s168 + $0x69] sm:$0xff]
        %v211 = vld [vmem:[%s168 + $0x79] sm:$0xff]
        %v212 = vld [vmem:[%s168 + $0x81] sm:$0xff]
        %v213 = vld [vmem:[%s168 + $0x91] sm:$0xff]
        %v214 = vld [vmem:[%s168 + $0x99] sm:$0xff]
        %v215 = vld [vmem:[%s168 + $0xa9] sm:$0xff]
        %v216 = vld [vmem:[%s168 + $0xb1] sm:$0xff]
        %v217 = vld [vmem:[%s168 + $0xc1] sm:$0xff]
        %v218 = vld [vmem:[%s168 + $0xc9] sm:$0xff]
        %v219 = vld [vmem:[%s168 + $0xd9] sm:$0xff]
        %v220 = vld [vmem:[%s168 + $0xe1] sm:$0xff]
        %v221 = vld [vmem:[%s168 + $0xf1] sm:$0xff]
        %v222 = vld [vmem:[%s168 + $0xf9] sm:$0xff]
        %v223 = vld [vmem:[%s168 + $0x109] sm:$0xff]
        %v224 = vld [vmem:[%s168 + $0x111] sm:$0xff]
        %v225 = vld [vmem:[%s168 + $0x121] sm:$0xff]
        %v226 = vld [vmem:[%s168 + $0x129] sm:$0xff]
        %v227 = vld [vmem:[%s168 + $0x139] sm:$0xff]
        %v228 = vld [vmem:[%s168 + $0x141] sm:$0xff]
        %v229 = vld [vmem:[%s168 + $0x151] sm:$0xff]
        %v230 = vld [vmem:[%s168 + $0x159] sm:$0xff]
        %v231 = vld [vmem:[%s168 + $0x169] sm:$0xff]
        %v232 = vld [vmem:[%s168 + $0x171] sm:$0xff]
        %v233 = vld [vmem:[%s168 + $0x2] sm:$0xff]
        %v234 = vld [vmem:[%s168 + $0xa] sm:$0xff]
        %v235 = vld [vmem:[%s168 + $0x1a] sm:$0xff]
        %v236 = vld [vmem:[%s168 + $0x22] sm:$0xff]
        %v237 = vld [vmem:[%s168 + $0x32] sm:$0xff]
        %v238 = vld [vmem:[%s168 + $0x3a] sm:$0xff]
        %v239 = vld [vmem:[%s168 + $0x4a] sm:$0xff]
        %v240 = vld [vmem:[%s168 + $0x52] sm:$0xff]
        %v241 = vld [vmem:[%s168 + $0x62] sm:$0xff]
        %v242 = vld [vmem:[%s168 + $0x6a] sm:$0xff]
        %v243 = vld [vmem:[%s168 + $0x7a] sm:$0xff]
        %v244 = vld [vmem:[%s168 + $0x82] sm:$0xff]
        %v245 = vld [vmem:[%s168 + $0x92] sm:$0xff]
        %v246 = vld [vmem:[%s168 + $0x9a] sm:$0xff]
        %v247 = vld [vmem:[%s168 + $0xaa] sm:$0xff]
        %v248 = vld [vmem:[%s168 + $0xb2] sm:$0xff]
        %v249 = vld [vmem:[%s168 + $0xc2] sm:$0xff]
        %v250 = vld [vmem:[%s168 + $0xca] sm:$0xff]
        %v251 = vld [vmem:[%s168 + $0xda] sm:$0xff]
        %v252 = vld [vmem:[%s168 + $0xe2] sm:$0xff]
        %v253 = vld [vmem:[%s168 + $0xf2] sm:$0xff]
        %v254 = vld [vmem:[%s168 + $0xfa] sm:$0xff]
        %v255 = vld [vmem:[%s168 + $0x10a] sm:$0xff]
        %v256 = vld [vmem:[%s168 + $0x112] sm:$0xff]
        %v257 = vld [vmem:[%s168 + $0x122] sm:$0xff]
        %v258 = vld [vmem:[%s168 + $0x12a] sm:$0xff]
        %v259 = vld [vmem:[%s168 + $0x13a] sm:$0xff]
        %v260 = vld [vmem:[%s168 + $0x142] sm:$0xff]
        %v261 = vld [vmem:[%s168 + $0x152] sm:$0xff]
        %v262 = vld [vmem:[%s168 + $0x15a] sm:$0xff]
        %v263 = vld [vmem:[%s168 + $0x16a] sm:$0xff]
        %v264 = vld [vmem:[%s168 + $0x172] sm:$0xff]
        %s265 = scalar_lea.vmem %s168, 24
        %v266 = vld [vmem:[%s265] sm:$0xff]
        %v267 = vld [vmem:[%s265 + $0x8] sm:$0xff]
        %v268 = vld [vmem:[%s265 + $0x18] sm:$0xff]
        %v269 = vld [vmem:[%s265 + $0x20] sm:$0xff]
        %v270 = vld [vmem:[%s265 + $0x30] sm:$0xff]
        %v271 = vld [vmem:[%s265 + $0x38] sm:$0xff]
        %v272 = vld [vmem:[%s265 + $0x48] sm:$0xff]
        %v273 = vld [vmem:[%s265 + $0x50] sm:$0xff]
        %v274 = vld [vmem:[%s265 + $0x60] sm:$0xff]
        %v275 = vld [vmem:[%s265 + $0x68] sm:$0xff]
        %v276 = vld [vmem:[%s265 + $0x78] sm:$0xff]
        %v277 = vld [vmem:[%s265 + $0x80] sm:$0xff]
        %v278 = vld [vmem:[%s265 + $0x90] sm:$0xff]
        %v279 = vld [vmem:[%s265 + $0x98] sm:$0xff]
        %v280 = vld [vmem:[%s265 + $0xa8] sm:$0xff]
        %v281 = vld [vmem:[%s265 + $0xb0] sm:$0xff]
        %v282 = vld [vmem:[%s265 + $0xc0] sm:$0xff]
        %v283 = vld [vmem:[%s265 + $0xc8] sm:$0xff]
        %v284 = vld [vmem:[%s265 + $0xd8] sm:$0xff]
        %v285 = vld [vmem:[%s265 + $0xe0] sm:$0xff]
        %v286 = vld [vmem:[%s265 + $0xf0] sm:$0xff]
        %v287 = vld [vmem:[%s265 + $0xf8] sm:$0xff]
        %v288 = vld [vmem:[%s265 + $0x108] sm:$0xff]
        %v289 = vld [vmem:[%s265 + $0x110] sm:$0xff]
        %v290 = vld [vmem:[%s265 + $0x120] sm:$0xff]
        %v291 = vld [vmem:[%s265 + $0x128] sm:$0xff]
        %v292 = vld [vmem:[%s265 + $0x138] sm:$0xff]
        %v293 = vld [vmem:[%s265 + $0x140] sm:$0xff]
        %v294 = vld [vmem:[%s265 + $0x150] sm:$0xff]
        %v295 = vld [vmem:[%s265 + $0x158] sm:$0xff]
        %v296 = vld [vmem:[%s265 + $0x168] sm:$0xff]
        %v297 = vld [vmem:[%s265 + $0x170] sm:$0xff]
        %v298 = vld [vmem:[%s265 + $0x1] sm:$0xff]
        %v299 = vld [vmem:[%s265 + $0x9] sm:$0xff]
        %v300 = vld [vmem:[%s265 + $0x19] sm:$0xff]
        %v301 = vld [vmem:[%s265 + $0x21] sm:$0xff]
        %v302 = vld [vmem:[%s265 + $0x31] sm:$0xff]
        %v303 = vld [vmem:[%s265 + $0x39] sm:$0xff]
        %v304 = vld [vmem:[%s265 + $0x49] sm:$0xff]
        %v305 = vld [vmem:[%s265 + $0x51] sm:$0xff]
        %v306 = vld [vmem:[%s265 + $0x61] sm:$0xff]
        %v307 = vld [vmem:[%s265 + $0x69] sm:$0xff]
        %v308 = vld [vmem:[%s265 + $0x79] sm:$0xff]
        %v309 = vld [vmem:[%s265 + $0x81] sm:$0xff]
        %v310 = vld [vmem:[%s265 + $0x91] sm:$0xff]
        %v311 = vld [vmem:[%s265 + $0x99] sm:$0xff]
        %v312 = vld [vmem:[%s265 + $0xa9] sm:$0xff]
        %v313 = vld [vmem:[%s265 + $0xb1] sm:$0xff]
        %v314 = vld [vmem:[%s265 + $0xc1] sm:$0xff]
        %v315 = vld [vmem:[%s265 + $0xc9] sm:$0xff]
        %v316 = vld [vmem:[%s265 + $0xd9] sm:$0xff]
        %v317 = vld [vmem:[%s265 + $0xe1] sm:$0xff]
        %v318 = vld [vmem:[%s265 + $0xf1] sm:$0xff]
        %v319 = vld [vmem:[%s265 + $0xf9] sm:$0xff]
        %v320 = vld [vmem:[%s265 + $0x109] sm:$0xff]
        %v321 = vld [vmem:[%s265 + $0x111] sm:$0xff]
        %v322 = vld [vmem:[%s265 + $0x121] sm:$0xff]
        %v323 = vld [vmem:[%s265 + $0x129] sm:$0xff]
        %v324 = vld [vmem:[%s265 + $0x139] sm:$0xff]
        %v325 = vld [vmem:[%s265 + $0x141] sm:$0xff]
        %v326 = vld [vmem:[%s265 + $0x151] sm:$0xff]
        %v327 = vld [vmem:[%s265 + $0x159] sm:$0xff]
        %v328 = vld [vmem:[%s265 + $0x169] sm:$0xff]
        %v329 = vld [vmem:[%s265 + $0x171] sm:$0xff]
        %v330 = vld [vmem:[%s265 + $0x2] sm:$0xff]
        %v331 = vld [vmem:[%s265 + $0xa] sm:$0xff]
        %v332 = vld [vmem:[%s265 + $0x1a] sm:$0xff]
        %v333 = vld [vmem:[%s265 + $0x22] sm:$0xff]
        %v334 = vld [vmem:[%s265 + $0x32] sm:$0xff]
        %v335 = vld [vmem:[%s265 + $0x3a] sm:$0xff]
        %v336 = vld [vmem:[%s265 + $0x4a] sm:$0xff]
        %v337 = vld [vmem:[%s265 + $0x52] sm:$0xff]
        %v338 = vld [vmem:[%s265 + $0x62] sm:$0xff]
        %v339 = vld [vmem:[%s265 + $0x6a] sm:$0xff]
        %v340 = vld [vmem:[%s265 + $0x7a] sm:$0xff]
        %v341 = vld [vmem:[%s265 + $0x82] sm:$0xff]
        %v342 = vld [vmem:[%s265 + $0x92] sm:$0xff]
        %v343 = vld [vmem:[%s265 + $0x9a] sm:$0xff]
        %v344 = vld [vmem:[%s265 + $0xaa] sm:$0xff]
        %v345 = vld [vmem:[%s265 + $0xb2] sm:$0xff]
        %v346 = vld [vmem:[%s265 + $0xc2] sm:$0xff]
        %v347 = vld [vmem:[%s265 + $0xca] sm:$0xff]
        %v348 = vld [vmem:[%s265 + $0xda] sm:$0xff]
        %v349 = vld [vmem:[%s265 + $0xe2] sm:$0xff]
        %v350 = vld [vmem:[%s265 + $0xf2] sm:$0xff]
        %v351 = vld [vmem:[%s265 + $0xfa] sm:$0xff]
        %v352 = vld [vmem:[%s265 + $0x10a] sm:$0xff]
        %v353 = vld [vmem:[%s265 + $0x112] sm:$0xff]
        %v354 = vld [vmem:[%s265 + $0x122] sm:$0xff]
        %v355 = vld [vmem:[%s265 + $0x12a] sm:$0xff]
        %v356 = vld [vmem:[%s265 + $0x13a] sm:$0xff]
        %v357 = vld [vmem:[%s265 + $0x142] sm:$0xff]
        %v358 = vld [vmem:[%s265 + $0x152] sm:$0xff]
        %v359 = vld [vmem:[%s265 + $0x15a] sm:$0xff]
        %v360 = vld [vmem:[%s265 + $0x16a] sm:$0xff]
        %v361 = vld [vmem:[%s265 + $0x172] sm:$0xff]
        %s362 = scalar_lea.vmem %s168, 48
        %v363 = vld [vmem:[%s362] sm:$0xff]
        %v364 = vld [vmem:[%s362 + $0x8] sm:$0xff]
        %v365 = vld [vmem:[%s362 + $0x18] sm:$0xff]
        %v366 = vld [vmem:[%s362 + $0x20] sm:$0xff]
        %v367 = vld [vmem:[%s362 + $0x30] sm:$0xff]
        %v368 = vld [vmem:[%s362 + $0x38] sm:$0xff]
        %v369 = vld [vmem:[%s362 + $0x48] sm:$0xff]
        %v370 = vld [vmem:[%s362 + $0x50] sm:$0xff]
        %v371 = vld [vmem:[%s362 + $0x60] sm:$0xff]
        %v372 = vld [vmem:[%s362 + $0x68] sm:$0xff]
        %v373 = vld [vmem:[%s362 + $0x78] sm:$0xff]
        %v374 = vld [vmem:[%s362 + $0x80] sm:$0xff]
        %v375 = vld [vmem:[%s362 + $0x90] sm:$0xff]
        %v376 = vld [vmem:[%s362 + $0x98] sm:$0xff]
        %v377 = vld [vmem:[%s362 + $0xa8] sm:$0xff]
        %v378 = vld [vmem:[%s362 + $0xb0] sm:$0xff]
        %v379 = vld [vmem:[%s362 + $0xc0] sm:$0xff]
        %v380 = vld [vmem:[%s362 + $0xc8] sm:$0xff]
        %v381 = vld [vmem:[%s362 + $0xd8] sm:$0xff]
        %v382 = vld [vmem:[%s362 + $0xe0] sm:$0xff]
        %v383 = vld [vmem:[%s362 + $0xf0] sm:$0xff]
        %v384 = vld [vmem:[%s362 + $0xf8] sm:$0xff]
        %v385 = vld [vmem:[%s362 + $0x108] sm:$0xff]
        %v386 = vld [vmem:[%s362 + $0x110] sm:$0xff]
        %v387 = vld [vmem:[%s362 + $0x120] sm:$0xff]
        %v388 = vld [vmem:[%s362 + $0x128] sm:$0xff]
        %v389 = vld [vmem:[%s362 + $0x138] sm:$0xff]
        %v390 = vld [vmem:[%s362 + $0x140] sm:$0xff]
        %v391 = vld [vmem:[%s362 + $0x150] sm:$0xff]
        %v392 = vld [vmem:[%s362 + $0x158] sm:$0xff]
        %v393 = vld [vmem:[%s362 + $0x168] sm:$0xff]
        %v394 = vld [vmem:[%s362 + $0x170] sm:$0xff]
        %v395 = vld [vmem:[%s362 + $0x1] sm:$0xff]
        %v396 = vld [vmem:[%s362 + $0x9] sm:$0xff]
        %v397 = vld [vmem:[%s362 + $0x19] sm:$0xff]
        %v398 = vld [vmem:[%s362 + $0x21] sm:$0xff]
        %v399 = vld [vmem:[%s362 + $0x31] sm:$0xff]
        %v400 = vld [vmem:[%s362 + $0x39] sm:$0xff]
        %v401 = vld [vmem:[%s362 + $0x49] sm:$0xff]
        %v402 = vld [vmem:[%s362 + $0x51] sm:$0xff]
        %v403 = vld [vmem:[%s362 + $0x61] sm:$0xff]
        %v404 = vld [vmem:[%s362 + $0x69] sm:$0xff]
        %v405 = vld [vmem:[%s362 + $0x79] sm:$0xff]
        %v406 = vld [vmem:[%s362 + $0x81] sm:$0xff]
        %v407 = vld [vmem:[%s362 + $0x91] sm:$0xff]
        %v408 = vld [vmem:[%s362 + $0x99] sm:$0xff]
        %v409 = vld [vmem:[%s362 + $0xa9] sm:$0xff]
        %v410 = vld [vmem:[%s362 + $0xb1] sm:$0xff]
        %v411 = vld [vmem:[%s362 + $0xc1] sm:$0xff]
        %v412 = vld [vmem:[%s362 + $0xc9] sm:$0xff]
        %v413 = vld [vmem:[%s362 + $0xd9] sm:$0xff]
        %v414 = vld [vmem:[%s362 + $0xe1] sm:$0xff]
        %v415 = vld [vmem:[%s362 + $0xf1] sm:$0xff]
        %v416 = vld [vmem:[%s362 + $0xf9] sm:$0xff]
        %v417 = vld [vmem:[%s362 + $0x109] sm:$0xff]
        %v418 = vld [vmem:[%s362 + $0x111] sm:$0xff]
        %v419 = vld [vmem:[%s362 + $0x121] sm:$0xff]
        %v420 = vld [vmem:[%s362 + $0x129] sm:$0xff]
        %v421 = vld [vmem:[%s362 + $0x139] sm:$0xff]
        %v422 = vld [vmem:[%s362 + $0x141] sm:$0xff]
        %v423 = vld [vmem:[%s362 + $0x151] sm:$0xff]
        %v424 = vld [vmem:[%s362 + $0x159] sm:$0xff]
        %v425 = vld [vmem:[%s362 + $0x169] sm:$0xff]
        %v426 = vld [vmem:[%s362 + $0x171] sm:$0xff]
        %v427 = vld [vmem:[%s362 + $0x2] sm:$0xff]
        %v428 = vld [vmem:[%s362 + $0xa] sm:$0xff]
        %v429 = vld [vmem:[%s362 + $0x1a] sm:$0xff]
        %v430 = vld [vmem:[%s362 + $0x22] sm:$0xff]
        %v431 = vld [vmem:[%s362 + $0x32] sm:$0xff]
        %v432 = vld [vmem:[%s362 + $0x3a] sm:$0xff]
        %v433 = vld [vmem:[%s362 + $0x4a] sm:$0xff]
        %v434 = vld [vmem:[%s362 + $0x52] sm:$0xff]
        %v435 = vld [vmem:[%s362 + $0x62] sm:$0xff]
        %v436 = vld [vmem:[%s362 + $0x6a] sm:$0xff]
        %v437 = vld [vmem:[%s362 + $0x7a] sm:$0xff]
        %v438 = vld [vmem:[%s362 + $0x82] sm:$0xff]
        %v439 = vld [vmem:[%s362 + $0x92] sm:$0xff]
        %v440 = vld [vmem:[%s362 + $0x9a] sm:$0xff]
        %v441 = vld [vmem:[%s362 + $0xaa] sm:$0xff]
        %v442 = vld [vmem:[%s362 + $0xb2] sm:$0xff]
        %v443 = vld [vmem:[%s362 + $0xc2] sm:$0xff]
        %v444 = vld [vmem:[%s362 + $0xca] sm:$0xff]
        %v445 = vld [vmem:[%s362 + $0xda] sm:$0xff]
        %v446 = vld [vmem:[%s362 + $0xe2] sm:$0xff]
        %v447 = vld [vmem:[%s362 + $0xf2] sm:$0xff]
        %v448 = vld [vmem:[%s362 + $0xfa] sm:$0xff]
        %v449 = vld [vmem:[%s362 + $0x10a] sm:$0xff]
        %v450 = vld [vmem:[%s362 + $0x112] sm:$0xff]
        %v451 = vld [vmem:[%s362 + $0x122] sm:$0xff]
        %v452 = vld [vmem:[%s362 + $0x12a] sm:$0xff]
        %v453 = vld [vmem:[%s362 + $0x13a] sm:$0xff]
        %v454 = vld [vmem:[%s362 + $0x142] sm:$0xff]
        %v455 = vld [vmem:[%s362 + $0x152] sm:$0xff]
        %v456 = vld [vmem:[%s362 + $0x15a] sm:$0xff]
        %v457 = vld [vmem:[%s362 + $0x16a] sm:$0xff]
        %v458 = vld [vmem:[%s362 + $0x172] sm:$0xff]
        %v459 = vld [vmem:[%s1] sm:$0xff]
        %v460 = vld [vmem:[%s1 + $0x8] sm:$0xff]
        %v461 = vld [vmem:[%s1 + $0x10] sm:$0xff]
        %v462 = vld [vmem:[%s1 + $0x18] sm:$0xff]
        %v463 = vld [vmem:[%s1 + $0x20] sm:$0xff]
        %v464 = vld [vmem:[%s1 + $0x28] sm:$0xff]
        %v465 = vld [vmem:[%s1 + $0x30] sm:$0xff]
        %v466 = vld [vmem:[%s1 + $0x38] sm:$0xff]
        %v467 = vld [vmem:[%s1 + $0x40] sm:$0xff]
        %v468 = vld [vmem:[%s1 + $0x48] sm:$0xff]
        %v469 = vld [vmem:[%s1 + $0x50] sm:$0xff]
        %v470 = vld [vmem:[%s1 + $0x58] sm:$0xff]
        %v471 = vld [vmem:[%s1 + $0x60] sm:$0xff]
        %v472 = vld [vmem:[%s1 + $0x68] sm:$0xff]
        %v473 = vld [vmem:[%s1 + $0x70] sm:$0xff]
        %v474 = vld [vmem:[%s1 + $0x78] sm:$0xff]
        %v475 = vld [vmem:[%s1 + $0x80] sm:$0xff]
        %v476 = vld [vmem:[%s1 + $0x88] sm:$0xff]
        %v477 = vld [vmem:[%s1 + $0x90] sm:$0xff]
        %v478 = vld [vmem:[%s1 + $0x98] sm:$0xff]
        %v479 = vld [vmem:[%s1 + $0xa0] sm:$0xff]
        %v480 = vld [vmem:[%s1 + $0xa8] sm:$0xff]
        %v481 = vld [vmem:[%s1 + $0xb0] sm:$0xff]
        %v482 = vld [vmem:[%s1 + $0xb8] sm:$0xff]
        %v483 = vld [vmem:[%s1 + $0xc0] sm:$0xff]
        %v484 = vld [vmem:[%s1 + $0xc8] sm:$0xff]
        %v485 = vld [vmem:[%s1 + $0xd0] sm:$0xff]
        %v486 = vld [vmem:[%s1 + $0xd8] sm:$0xff]
        %v487 = vld [vmem:[%s1 + $0xe0] sm:$0xff]
        %v488 = vld [vmem:[%s1 + $0xe8] sm:$0xff]
        %v489 = vld [vmem:[%s1 + $0xf0] sm:$0xff]
        %v490 = vld [vmem:[%s1 + $0xf8] sm:$0xff]
        %v491 = vld [vmem:[%s1 + $0x100] sm:$0xff]
        %v492 = vld [vmem:[%s1 + $0x108] sm:$0xff]
        %v493 = vld [vmem:[%s1 + $0x110] sm:$0xff]
        %v494 = vld [vmem:[%s1 + $0x118] sm:$0xff]
        %v495 = vld [vmem:[%s1 + $0x120] sm:$0xff]
        %v496 = vld [vmem:[%s1 + $0x128] sm:$0xff]
        %v497 = vld [vmem:[%s1 + $0x130] sm:$0xff]
        %v498 = vld [vmem:[%s1 + $0x138] sm:$0xff]
        %v499 = vld [vmem:[%s1 + $0x140] sm:$0xff]
        %v500 = vld [vmem:[%s1 + $0x148] sm:$0xff]
        %v501 = vld [vmem:[%s1 + $0x150] sm:$0xff]
        %v502 = vld [vmem:[%s1 + $0x158] sm:$0xff]
        %v503 = vld [vmem:[%s1 + $0x160] sm:$0xff]
        %v504 = vld [vmem:[%s1 + $0x168] sm:$0xff]
        %v505 = vld [vmem:[%s1 + $0x170] sm:$0xff]
        %v506 = vld [vmem:[%s1 + $0x178] sm:$0xff]
        %v507 = vld [vmem:[%s1 + $0x180] sm:$0xff]
        %v508 = vld [vmem:[%s1 + $0x188] sm:$0xff]
        %v509 = vld [vmem:[%s1 + $0x190] sm:$0xff]
        %v510 = vld [vmem:[%s1 + $0x198] sm:$0xff]
        %v511 = vld [vmem:[%s1 + $0x1a0] sm:$0xff]
        %v512 = vld [vmem:[%s1 + $0x1a8] sm:$0xff]
        %v513 = vld [vmem:[%s1 + $0x1b0] sm:$0xff]
        %v514 = vld [vmem:[%s1 + $0x1b8] sm:$0xff]
        %v515 = vld [vmem:[%s1 + $0x1c0] sm:$0xff]
        %v516 = vld [vmem:[%s1 + $0x1c8] sm:$0xff]
        %v517 = vld [vmem:[%s1 + $0x1d0] sm:$0xff]
        %v518 = vld [vmem:[%s1 + $0x1d8] sm:$0xff]
        %v519 = vld [vmem:[%s1 + $0x1e0] sm:$0xff]
        %v520 = vld [vmem:[%s1 + $0x1e8] sm:$0xff]
        %v521 = vld [vmem:[%s1 + $0x1f0] sm:$0xff]
        %v522 = vld [vmem:[%s1 + $0x1f8] sm:$0xff]
        %v523 = vld [vmem:[%s1 + $0x200] sm:$0xff]
        %v524 = vld [vmem:[%s1 + $0x208] sm:$0xff]
        %v525 = vld [vmem:[%s1 + $0x210] sm:$0xff]
        %v526 = vld [vmem:[%s1 + $0x218] sm:$0xff]
        %v527 = vld [vmem:[%s1 + $0x220] sm:$0xff]
        %v528 = vld [vmem:[%s1 + $0x228] sm:$0xff]
        %v529 = vld [vmem:[%s1 + $0x230] sm:$0xff]
        %v530 = vld [vmem:[%s1 + $0x238] sm:$0xff]
        %v531 = vld [vmem:[%s1 + $0x240] sm:$0xff]
        %v532 = vld [vmem:[%s1 + $0x248] sm:$0xff]
        %v533 = vld [vmem:[%s1 + $0x250] sm:$0xff]
        %v534 = vld [vmem:[%s1 + $0x258] sm:$0xff]
        %v535 = vld [vmem:[%s1 + $0x260] sm:$0xff]
        %v536 = vld [vmem:[%s1 + $0x268] sm:$0xff]
        %v537 = vld [vmem:[%s1 + $0x270] sm:$0xff]
        %v538 = vld [vmem:[%s1 + $0x278] sm:$0xff]
        %v539 = vld [vmem:[%s1 + $0x280] sm:$0xff]
        %v540 = vld [vmem:[%s1 + $0x288] sm:$0xff]
        %v541 = vld [vmem:[%s1 + $0x290] sm:$0xff]
        %v542 = vld [vmem:[%s1 + $0x298] sm:$0xff]
        %v543 = vld [vmem:[%s1 + $0x2a0] sm:$0xff]
        %v544 = vld [vmem:[%s1 + $0x2a8] sm:$0xff]
        %v545 = vld [vmem:[%s1 + $0x2b0] sm:$0xff]
        %v546 = vld [vmem:[%s1 + $0x2b8] sm:$0xff]
        %v547 = vld [vmem:[%s1 + $0x2c0] sm:$0xff]
        %v548 = vld [vmem:[%s1 + $0x2c8] sm:$0xff]
        %v549 = vld [vmem:[%s1 + $0x2d0] sm:$0xff]
        %v550 = vld [vmem:[%s1 + $0x2d8] sm:$0xff]
        %v551 = vld [vmem:[%s1 + $0x2e0] sm:$0xff]
        %v552 = vld [vmem:[%s1 + $0x2e8] sm:$0xff]
        %v553 = vld [vmem:[%s1 + $0x2f0] sm:$0xff]
        %v554 = vld [vmem:[%s1 + $0x2f8] sm:$0xff]
        %v555 = vld [vmem:[%s1 + $0x300] sm:$0xff]
        %v556 = vld [vmem:[%s1 + $0x308] sm:$0xff]
        %v557 = vld [vmem:[%s1 + $0x310] sm:$0xff]
        %v558 = vld [vmem:[%s1 + $0x318] sm:$0xff]
        %v559 = vld [vmem:[%s1 + $0x320] sm:$0xff]
        %v560 = vld [vmem:[%s1 + $0x328] sm:$0xff]
        %v561 = vld [vmem:[%s1 + $0x330] sm:$0xff]
        %v562 = vld [vmem:[%s1 + $0x338] sm:$0xff]
        %v563 = vld [vmem:[%s1 + $0x340] sm:$0xff]
        %v564 = vld [vmem:[%s1 + $0x348] sm:$0xff]
        %v565 = vld [vmem:[%s1 + $0x350] sm:$0xff]
        %v566 = vld [vmem:[%s1 + $0x358] sm:$0xff]
        %v567 = vld [vmem:[%s1 + $0x360] sm:$0xff]
        %v568 = vld [vmem:[%s1 + $0x368] sm:$0xff]
        %v569 = vld [vmem:[%s1 + $0x370] sm:$0xff]
        %v570 = vld [vmem:[%s1 + $0x378] sm:$0xff]
        %v571 = vld [vmem:[%s1 + $0x380] sm:$0xff]
        %v572 = vld [vmem:[%s1 + $0x388] sm:$0xff]
        %v573 = vld [vmem:[%s1 + $0x390] sm:$0xff]
        %v574 = vld [vmem:[%s1 + $0x398] sm:$0xff]
        %v575 = vld [vmem:[%s1 + $0x3a0] sm:$0xff]
        %v576 = vld [vmem:[%s1 + $0x3a8] sm:$0xff]
        %v577 = vld [vmem:[%s1 + $0x3b0] sm:$0xff]
        %v578 = vld [vmem:[%s1 + $0x3b8] sm:$0xff]
        %v579 = vld [vmem:[%s1 + $0x3c0] sm:$0xff]
        %v580 = vld [vmem:[%s1 + $0x3c8] sm:$0xff]
        %v581 = vld [vmem:[%s1 + $0x3d0] sm:$0xff]
        %v582 = vld [vmem:[%s1 + $0x3d8] sm:$0xff]
        %v583 = vld [vmem:[%s1 + $0x3e0] sm:$0xff]
        %v584 = vld [vmem:[%s1 + $0x3e8] sm:$0xff]
        %v585 = vld [vmem:[%s1 + $0x3f0] sm:$0xff]
        %v586 = vld [vmem:[%s1 + $0x3f8] sm:$0xff]
        %v587 = vld [vmem:[%s1 + $0x400] sm:$0xff]
        %v588 = vld [vmem:[%s1 + $0x408] sm:$0xff]
        %v589 = vld [vmem:[%s1 + $0x410] sm:$0xff]
        %v590 = vld [vmem:[%s1 + $0x418] sm:$0xff]
        %v591 = vld [vmem:[%s1 + $0x420] sm:$0xff]
        %v592 = vld [vmem:[%s1 + $0x428] sm:$0xff]
        %v593 = vld [vmem:[%s1 + $0x430] sm:$0xff]
        %v594 = vld [vmem:[%s1 + $0x438] sm:$0xff]
        %v595 = vld [vmem:[%s1 + $0x440] sm:$0xff]
        %v596 = vld [vmem:[%s1 + $0x448] sm:$0xff]
        %v597 = vld [vmem:[%s1 + $0x450] sm:$0xff]
        %v598 = vld [vmem:[%s1 + $0x458] sm:$0xff]
        %v599 = vld [vmem:[%s1 + $0x460] sm:$0xff]
        %v600 = vld [vmem:[%s1 + $0x468] sm:$0xff]
        %v601 = vld [vmem:[%s1 + $0x470] sm:$0xff]
        %v602 = vld [vmem:[%s1 + $0x478] sm:$0xff]
        %v603 = vld [vmem:[%s2] sm:$0x1]
        %v605 = vlaneseq
        %v606 = vshrl.u32 %v605, 7
        %v607 = vsub.s32 0, %v606
        %v608 = vrot.slane %v603, %v607
        %610 = vmatprep.subr.mxu0 0.0
        %611 = vmatpush1.msra.mxu0 %v459
        %612 = vmatprep.subr.mxu0 0.0
        %613 = vmatpush1.msra.mxu0 %v460
        %614 = vmatprep.subr.mxu0 0.0
        %615 = vmatpush1.msra.mxu0 %v461
        %616 = vmatprep.subr.mxu0 0.0
        %617 = vmatpush1.msra.mxu0 %v462
        %618 = vmatprep.subr.mxu0 0.0
        %619 = vmatpush1.msra.mxu0 %v463
        %620 = vmatprep.subr.mxu0 0.0
        %621 = vmatpush1.msra.mxu0 %v464
        %622 = vmatprep.subr.mxu0 0.0
        %623 = vmatpush1.msra.mxu0 %v465
        %624 = vmatprep.subr.mxu0 0.0
        %625 = vmatpush1.msra.mxu0 %v466
        %626 = vmatprep.subr.mxu0 0.0
        %627 = vmatpush1.msra.mxu0 %v467
        %628 = vmatprep.subr.mxu0 0.0
        %629 = vmatpush1.msra.mxu0 %v468
        %630 = vmatprep.subr.mxu0 0.0
        %631 = vmatpush1.msra.mxu0 %v469
        %632 = vmatprep.subr.mxu0 0.0
        %633 = vmatpush1.msra.mxu0 %v470
        %634 = vmatprep.subr.mxu0 0.0
        %635 = vmatpush1.msra.mxu0 %v471
        %636 = vmatprep.subr.mxu0 0.0
        %637 = vmatpush1.msra.mxu0 %v472
        %638 = vmatprep.subr.mxu0 0.0
        %639 = vmatpush1.msra.mxu0 %v473
        %640 = vmatprep.subr.mxu0 0.0
        %641 = vmatpush1.msra.mxu0 %v474
        %642 = vmatprep.subr.mxu0 0.0
        %643 = vmatpush1.msra.mxu0 %v475
        %644 = vmatprep.subr.mxu0 0.0
        %645 = vmatpush1.msra.mxu0 %v476
        %646 = vmatprep.subr.mxu0 0.0
        %647 = vmatpush1.msra.mxu0 %v477
        %648 = vmatprep.subr.mxu0 0.0
        %649 = vmatpush1.msra.mxu0 %v478
        %650 = vmatprep.subr.mxu0 0.0
        %651 = vmatpush1.msra.mxu0 %v479
        %652 = vmatprep.subr.mxu0 0.0
        %653 = vmatpush1.msra.mxu0 %v480
        %654 = vmatprep.subr.mxu0 0.0
        %655 = vmatpush1.msra.mxu0 %v481
        %656 = vmatprep.subr.mxu0 0.0
        %657 = vmatpush1.msra.mxu0 %v482
        %658 = vmatprep.subr.mxu0 0.0
        %659 = vmatpush1.msra.mxu0 %v483
        %660 = vmatprep.subr.mxu0 0.0
        %661 = vmatpush1.msra.mxu0 %v484
        %662 = vmatprep.subr.mxu0 0.0
        %663 = vmatpush1.msra.mxu0 %v485
        %664 = vmatprep.subr.mxu0 0.0
        %665 = vmatpush1.msra.mxu0 %v486
        %666 = vmatprep.subr.mxu0 0.0
        %667 = vmatpush1.msra.mxu0 %v487
        %668 = vmatprep.subr.mxu0 0.0
        %669 = vmatpush1.msra.mxu0 %v488
        %670 = vmatprep.subr.mxu0 0.0
        %671 = vmatpush1.msra.mxu0 %v489
        %672 = vmatprep.subr.mxu0 0.0
        %673 = vmatpush1.msra.mxu0 %v490
        %674 = vmatprep.mubr.f32.mxu0 %v201
        %675 = vmatmul.mubr.f32.gmra.mrb[0].mxu0 %v169
        %v676 = vpop.f32.mrb[0].mxu0
        %v677 = vadd.f32 %v608, %v676
        %v678 = vpop.f32.mrb[0].mxu0
        %679 = vmatprep.mubr.f32.mxu0 %v202
        %680 = vmatmul.mubr.f32.gmra.mrb[0].mxu0 %v170
        %v681 = vpop.f32.mrb[0].mxu0
        %v682 = vadd.f32 %v608, %v681
        %v683 = vpop.f32.mrb[0].mxu0
        %684 = vmatprep.mubr.f32.mxu0 %v203
        %685 = vmatmul.mubr.f32.gmra.mrb[0].mxu0 %v171
        %v686 = vpop.f32.mrb[0].mxu0
        %v687 = vadd.f32 %v608, %v686
        %v688 = vpop.f32.mrb[0].mxu0
        %689 = vmatprep.mubr.f32.mxu0 %v204
        %690 = vmatmul.mubr.f32.gmra.mrb[0].mxu0 %v172
        %v691 = vpop.f32.mrb[0].mxu0
        %v692 = vadd.f32 %v608, %v691
        %v693 = vpop.f32.mrb[0].mxu0
        %694 = vmatprep.mubr.f32.mxu0 %v205
        %695 = vmatmul.mubr.f32.gmra.mrb[0].mxu0 %v173
        %v696 = vpop.f32.mrb[0].mxu0
        %v697 = vadd.f32 %v608, %v696
        %v698 = vpop.f32.mrb[0].mxu0
        %699 = vmatprep.mubr.f32.mxu0 %v206
        %700 = vmatmul.mubr.f32.gmra.mrb[0].mxu0 %v174
        %v701 = vpop.f32.mrb[0].mxu0
        %v702 = vadd.f32 %v608, %v701
        %v703 = vpop.f32.mrb[0].mxu0
        %704 = vmatprep.mubr.f32.mxu0 %v207
        %705 = vmatmul.mubr.f32.gmra.mrb[0].mxu0 %v175
        %v706 = vpop.f32.mrb[0].mxu0
        %v707 = vadd.f32 %v608, %v706
        %v708 = vpop.f32.mrb[0].mxu0
        %709 = vmatprep.mubr.f32.mxu0 %v208
        %710 = vmatmul.mubr.f32.gmra.mrb[0].mxu0 %v176
        %v711 = vpop.f32.mrb[0].mxu0
        %v712 = vadd.f32 %v608, %v711
        %v713 = vpop.f32.mrb[0].mxu0
        %714 = vmatprep.mubr.f32.mxu0 %v209
        %715 = vmatmul.mubr.f32.gmra.mrb[0].mxu0 %v177
        %v716 = vpop.f32.mrb[0].mxu0
        %v717 = vadd.f32 %v608, %v716
        %v718 = vpop.f32.mrb[0].mxu0
        %719 = vmatprep.mubr.f32.mxu0 %v210
        %720 = vmatmul.mubr.f32.gmra.mrb[0].mxu0 %v178
        %v721 = vpop.f32.mrb[0].mxu0
        %v722 = vadd.f32 %v608, %v721
        %v723 = vpop.f32.mrb[0].mxu0
        %724 = vmatprep.mubr.f32.mxu0 %v211
        %725 = vmatmul.mubr.f32.gmra.mrb[0].mxu0 %v179
        %v726 = vpop.f32.mrb[0].mxu0
        %v727 = vadd.f32 %v608, %v726
        %v728 = vpop.f32.mrb[0].mxu0
        %729 = vmatprep.mubr.f32.mxu0 %v212
        %730 = vmatmul.mubr.f32.gmra.mrb[0].mxu0 %v180
        %v731 = vpop.f32.mrb[0].mxu0
        %v732 = vadd.f32 %v608, %v731
        %v733 = vpop.f32.mrb[0].mxu0
        %734 = vmatprep.mubr.f32.mxu0 %v213
        %735 = vmatmul.mubr.f32.gmra.mrb[0].mxu0 %v181
        %v736 = vpop.f32.mrb[0].mxu0
        %v737 = vadd.f32 %v608, %v736
        %v738 = vpop.f32.mrb[0].mxu0
        %739 = vmatprep.mubr.f32.mxu0 %v214
        %740 = vmatmul.mubr.f32.gmra.mrb[0].mxu0 %v182
        %v741 = vpop.f32.mrb[0].mxu0
        %v742 = vadd.f32 %v608, %v741
        %v743 = vpop.f32.mrb[0].mxu0
        %744 = vmatprep.mubr.f32.mxu0 %v215
        %745 = vmatmul.mubr.f32.gmra.mrb[0].mxu0 %v183
        %v746 = vpop.f32.mrb[0].mxu0
        %v747 = vadd.f32 %v608, %v746
        %v748 = vpop.f32.mrb[0].mxu0
        %749 = vmatprep.mubr.f32.mxu0 %v216
        %750 = vmatmul.mubr.f32.gmra.mrb[0].mxu0 %v184
        %v751 = vpop.f32.mrb[0].mxu0
        %v752 = vadd.f32 %v608, %v751
        %v753 = vpop.f32.mrb[0].mxu0
        %754 = vmatprep.mubr.f32.mxu0 %v217
        %755 = vmatmul.mubr.f32.gmra.mrb[0].mxu0 %v185
        %v756 = vpop.f32.mrb[0].mxu0
        %v757 = vadd.f32 %v608, %v756
        %v758 = vpop.f32.mrb[0].mxu0
        %759 = vmatprep.mubr.f32.mxu0 %v218
        %760 = vmatmul.mubr.f32.gmra.mrb[0].mxu0 %v186
        %v761 = vpop.f32.mrb[0].mxu0
        %v762 = vadd.f32 %v608, %v761
        %v763 = vpop.f32.mrb[0].mxu0
        %764 = vmatprep.mubr.f32.mxu0 %v219
        %765 = vmatmul.mubr.f32.gmra.mrb[0].mxu0 %v187
        %v766 = vpop.f32.mrb[0].mxu0
        %v767 = vadd.f32 %v608, %v766
        %v768 = vpop.f32.mrb[0].mxu0
        %769 = vmatprep.mubr.f32.mxu0 %v220
        %770 = vmatmul.mubr.f32.gmra.mrb[0].mxu0 %v188
        %v771 = vpop.f32.mrb[0].mxu0
        %v772 = vadd.f32 %v608, %v771
        %v773 = vpop.f32.mrb[0].mxu0
        %774 = vmatprep.mubr.f32.mxu0 %v221
        %775 = vmatmul.mubr.f32.gmra.mrb[0].mxu0 %v189
        %v776 = vpop.f32.mrb[0].mxu0
        %v777 = vadd.f32 %v608, %v776
        %v778 = vpop.f32.mrb[0].mxu0
        %779 = vmatprep.mubr.f32.mxu0 %v222
        %780 = vmatmul.mubr.f32.gmra.mrb[0].mxu0 %v190
        %v781 = vpop.f32.mrb[0].mxu0
        %v782 = vadd.f32 %v608, %v781
        %v783 = vpop.f32.mrb[0].mxu0
        %784 = vmatprep.mubr.f32.mxu0 %v223
        %785 = vmatmul.mubr.f32.gmra.mrb[0].mxu0 %v191
        %v786 = vpop.f32.mrb[0].mxu0
        %v787 = vadd.f32 %v608, %v786
        %v788 = vpop.f32.mrb[0].mxu0
        %789 = vmatprep.mubr.f32.mxu0 %v224
        %790 = vmatmul.mubr.f32.gmra.mrb[0].mxu0 %v192
        %v791 = vpop.f32.mrb[0].mxu0
        %v792 = vadd.f32 %v608, %v791
        %v793 = vpop.f32.mrb[0].mxu0
        %794 = vmatprep.mubr.f32.mxu0 %v225
        %795 = vmatmul.mubr.f32.gmra.mrb[0].mxu0 %v193
        %v796 = vpop.f32.mrb[0].mxu0
        %v797 = vadd.f32 %v608, %v796
        %v798 = vpop.f32.mrb[0].mxu0
        %799 = vmatprep.mubr.f32.mxu0 %v226
        %800 = vmatmul.mubr.f32.gmra.mrb[0].mxu0 %v194
        %v801 = vpop.f32.mrb[0].mxu0
        %v802 = vadd.f32 %v608, %v801
        %v803 = vpop.f32.mrb[0].mxu0
        %804 = vmatprep.mubr.f32.mxu0 %v227
        %805 = vmatmul.mubr.f32.gmra.mrb[0].mxu0 %v195
        %v806 = vpop.f32.mrb[0].mxu0
        %v807 = vadd.f32 %v608, %v806
        %v808 = vpop.f32.mrb[0].mxu0
        %809 = vmatprep.mubr.f32.mxu0 %v228
        %810 = vmatmul.mubr.f32.gmra.mrb[0].mxu0 %v196
        %v811 = vpop.f32.mrb[0].mxu0
        %v812 = vadd.f32 %v608, %v811
        %v813 = vpop.f32.mrb[0].mxu0
        %814 = vmatprep.mubr.f32.mxu0 %v229
        %815 = vmatmul.mubr.f32.gmra.mrb[0].mxu0 %v197
        %v816 = vpop.f32.mrb[0].mxu0
        %v817 = vadd.f32 %v608, %v816
        %v818 = vpop.f32.mrb[0].mxu0
        %819 = vmatprep.mubr.f32.mxu0 %v230
        %820 = vmatmul.mubr.f32.gmra.mrb[0].mxu0 %v198
        %v821 = vpop.f32.mrb[0].mxu0
        %v822 = vadd.f32 %v608, %v821
        %v823 = vpop.f32.mrb[0].mxu0
        %824 = vmatprep.mubr.f32.mxu0 %v231
        %825 = vmatmul.mubr.f32.gmra.mrb[0].mxu0 %v199
        %v826 = vpop.f32.mrb[0].mxu0
        %v827 = vadd.f32 %v608, %v826
        %v828 = vpop.f32.mrb[0].mxu0
        %829 = vmatprep.mubr.f32.mxu0 %v232
        %830 = vmatmul.mubr.f32.gmra.mrb[0].mxu0 %v200
        %v831 = vpop.f32.mrb[0].mxu0
        %v832 = vadd.f32 %v608, %v831
        %v833 = vpop.f32.mrb[0].mxu0
        %834 = vdwg.mxu0
        %835 = vmatprep.subr.mxu0 0.0
        %836 = vmatpush1.msra.mxu0 %v491
        %837 = vmatprep.subr.mxu0 0.0
        %838 = vmatpush1.msra.mxu0 %v492
        %839 = vmatprep.subr.mxu0 0.0
        %840 = vmatpush1.msra.mxu0 %v493
        %841 = vmatprep.subr.mxu0 0.0
        %842 = vmatpush1.msra.mxu0 %v494
        %843 = vmatprep.subr.mxu0 0.0
        %844 = vmatpush1.msra.mxu0 %v495
        %845 = vmatprep.subr.mxu0 0.0
        %846 = vmatpush1.msra.mxu0 %v496
        %847 = vmatprep.subr.mxu0 0.0
        %848 = vmatpush1.msra.mxu0 %v497
        %849 = vmatprep.subr.mxu0 0.0
        %850 = vmatpush1.msra.mxu0 %v498
        %851 = vmatprep.subr.mxu0 0.0
        %852 = vmatpush1.msra.mxu0 %v499
        %853 = vmatprep.subr.mxu0 0.0
        %854 = vmatpush1.msra.mxu0 %v500
        %855 = vmatprep.subr.mxu0 0.0
        %856 = vmatpush1.msra.mxu0 %v501
        %857 = vmatprep.subr.mxu0 0.0
        %858 = vmatpush1.msra.mxu0 %v502
        %859 = vmatprep.subr.mxu0 0.0
        %860 = vmatpush1.msra.mxu0 %v503
        %861 = vmatprep.subr.mxu0 0.0
        %862 = vmatpush1.msra.mxu0 %v504
        %863 = vmatprep.subr.mxu0 0.0
        %864 = vmatpush1.msra.mxu0 %v505
        %865 = vmatprep.subr.mxu0 0.0
        %866 = vmatpush1.msra.mxu0 %v506
        %867 = vmatprep.subr.mxu0 0.0
        %868 = vmatpush1.msra.mxu0 %v507
        %869 = vmatprep.subr.mxu0 0.0
        %870 = vmatpush1.msra.mxu0 %v508
        %871 = vmatprep.subr.mxu0 0.0
        %872 = vmatpush1.msra.mxu0 %v509
        %873 = vmatprep.subr.mxu0 0.0
        %874 = vmatpush1.msra.mxu0 %v510
        %875 = vmatprep.subr.mxu0 0.0
        %876 = vmatpush1.msra.mxu0 %v511
        %877 = vmatprep.subr.mxu0 0.0
        %878 = vmatpush1.msra.mxu0 %v512
        %879 = vmatprep.subr.mxu0 0.0
        %880 = vmatpush1.msra.mxu0 %v513
        %881 = vmatprep.subr.mxu0 0.0
        %882 = vmatpush1.msra.mxu0 %v514
        %883 = vmatprep.subr.mxu0 0.0
        %884 = vmatpush1.msra.mxu0 %v515
        %885 = vmatprep.subr.mxu0 0.0
        %886 = vmatpush1.msra.mxu0 %v516
        %887 = vmatprep.subr.mxu0 0.0
        %888 = vmatpush1.msra.mxu0 %v517
        %889 = vmatprep.subr.mxu0 0.0
        %890 = vmatpush1.msra.mxu0 %v518
        %891 = vmatprep.subr.mxu0 0.0
        %892 = vmatpush1.msra.mxu0 %v519
        %893 = vmatprep.subr.mxu0 0.0
        %894 = vmatpush1.msra.mxu0 %v520
        %895 = vmatprep.subr.mxu0 0.0
        %896 = vmatpush1.msra.mxu0 %v521
        %897 = vmatprep.subr.mxu0 0.0
        %898 = vmatpush1.msra.mxu0 %v522
        %899 = vmatprep.mubr.f32.mxu0 %v266
        %900 = vmatmul.mubr.f32.gmra.mrb[0].mxu0 %v233
        %v901 = vpop.f32.mrb[0].mxu0
        %v902 = vadd.f32 %v677, %v901
        %v903 = vpop.f32.mrb[0].mxu0
        %904 = vmatprep.mubr.f32.mxu0 %v267
        %905 = vmatmul.mubr.f32.gmra.mrb[0].mxu0 %v234
        %v906 = vpop.f32.mrb[0].mxu0
        %v907 = vadd.f32 %v682, %v906
        %v908 = vpop.f32.mrb[0].mxu0
        %909 = vmatprep.mubr.f32.mxu0 %v268
        %910 = vmatmul.mubr.f32.gmra.mrb[0].mxu0 %v235
        %v911 = vpop.f32.mrb[0].mxu0
        %v912 = vadd.f32 %v687, %v911
        %v913 = vpop.f32.mrb[0].mxu0
        %914 = vmatprep.mubr.f32.mxu0 %v269
        %915 = vmatmul.mubr.f32.gmra.mrb[0].mxu0 %v236
        %v916 = vpop.f32.mrb[0].mxu0
        %v917 = vadd.f32 %v692, %v916
        %v918 = vpop.f32.mrb[0].mxu0
        %919 = vmatprep.mubr.f32.mxu0 %v270
        %920 = vmatmul.mubr.f32.gmra.mrb[0].mxu0 %v237
        %v921 = vpop.f32.mrb[0].mxu0
        %v922 = vadd.f32 %v697, %v921
        %v923 = vpop.f32.mrb[0].mxu0
        %924 = vmatprep.mubr.f32.mxu0 %v271
        %925 = vmatmul.mubr.f32.gmra.mrb[0].mxu0 %v238
        %v926 = vpop.f32.mrb[0].mxu0
        %v927 = vadd.f32 %v702, %v926
        %v928 = vpop.f32.mrb[0].mxu0
        %929 = vmatprep.mubr.f32.mxu0 %v272
        %930 = vmatmul.mubr.f32.gmra.mrb[0].mxu0 %v239
        %v931 = vpop.f32.mrb[0].mxu0
        %v932 = vadd.f32 %v707, %v931
        %v933 = vpop.f32.mrb[0].mxu0
        %934 = vmatprep.mubr.f32.mxu0 %v273
        %935 = vmatmul.mubr.f32.gmra.mrb[0].mxu0 %v240
        %v936 = vpop.f32.mrb[0].mxu0
        %v937 = vadd.f32 %v712, %v936
        %v938 = vpop.f32.mrb[0].mxu0
        %939 = vmatprep.mubr.f32.mxu0 %v274
        %940 = vmatmul.mubr.f32.gmra.mrb[0].mxu0 %v241
        %v941 = vpop.f32.mrb[0].mxu0
        %v942 = vadd.f32 %v717, %v941
        %v943 = vpop.f32.mrb[0].mxu0
        %944 = vmatprep.mubr.f32.mxu0 %v275
        %945 = vmatmul.mubr.f32.gmra.mrb[0].mxu0 %v242
        %v946 = vpop.f32.mrb[0].mxu0
        %v947 = vadd.f32 %v722, %v946
        %v948 = vpop.f32.mrb[0].mxu0
        %949 = vmatprep.mubr.f32.mxu0 %v276
        %950 = vmatmul.mubr.f32.gmra.mrb[0].mxu0 %v243
        %v951 = vpop.f32.mrb[0].mxu0
        %v952 = vadd.f32 %v727, %v951
        %v953 = vpop.f32.mrb[0].mxu0
        %954 = vmatprep.mubr.f32.mxu0 %v277
        %955 = vmatmul.mubr.f32.gmra.mrb[0].mxu0 %v244
        %v956 = vpop.f32.mrb[0].mxu0
        %v957 = vadd.f32 %v732, %v956
        %v958 = vpop.f32.mrb[0].mxu0
        %959 = vmatprep.mubr.f32.mxu0 %v278
        %960 = vmatmul.mubr.f32.gmra.mrb[0].mxu0 %v245
        %v961 = vpop.f32.mrb[0].mxu0
        %v962 = vadd.f32 %v737, %v961
        %v963 = vpop.f32.mrb[0].mxu0
        %964 = vmatprep.mubr.f32.mxu0 %v279
        %965 = vmatmul.mubr.f32.gmra.mrb[0].mxu0 %v246
        %v966 = vpop.f32.mrb[0].mxu0
        %v967 = vadd.f32 %v742, %v966
        %v968 = vpop.f32.mrb[0].mxu0
        %969 = vmatprep.mubr.f32.mxu0 %v280
        %970 = vmatmul.mubr.f32.gmra.mrb[0].mxu0 %v247
        %v971 = vpop.f32.mrb[0].mxu0
        %v972 = vadd.f32 %v747, %v971
        %v973 = vpop.f32.mrb[0].mxu0
        %974 = vmatprep.mubr.f32.mxu0 %v281
        %975 = vmatmul.mubr.f32.gmra.mrb[0].mxu0 %v248
        %v976 = vpop.f32.mrb[0].mxu0
        %v977 = vadd.f32 %v752, %v976
        %v978 = vpop.f32.mrb[0].mxu0
        %979 = vmatprep.mubr.f32.mxu0 %v282
        %980 = vmatmul.mubr.f32.gmra.mrb[0].mxu0 %v249
        %v981 = vpop.f32.mrb[0].mxu0
        %v982 = vadd.f32 %v757, %v981
        %v983 = vpop.f32.mrb[0].mxu0
        %984 = vmatprep.mubr.f32.mxu0 %v283
        %985 = vmatmul.mubr.f32.gmra.mrb[0].mxu0 %v250
        %v986 = vpop.f32.mrb[0].mxu0
        %v987 = vadd.f32 %v762, %v986
        %v988 = vpop.f32.mrb[0].mxu0
        %989 = vmatprep.mubr.f32.mxu0 %v284
        %990 = vmatmul.mubr.f32.gmra.mrb[0].mxu0 %v251
        %v991 = vpop.f32.mrb[0].mxu0
        %v992 = vadd.f32 %v767, %v991
        %v993 = vpop.f32.mrb[0].mxu0
        %994 = vmatprep.mubr.f32.mxu0 %v285
        %995 = vmatmul.mubr.f32.gmra.mrb[0].mxu0 %v252
        %v996 = vpop.f32.mrb[0].mxu0
        %v997 = vadd.f32 %v772, %v996
        %v998 = vpop.f32.mrb[0].mxu0
        %999 = vmatprep.mubr.f32.mxu0 %v286
        %1000 = vmatmul.mubr.f32.gmra.mrb[0].mxu0 %v253
        %v1001 = vpop.f32.mrb[0].mxu0
        %v1002 = vadd.f32 %v777, %v1001
        %v1003 = vpop.f32.mrb[0].mxu0
        %1004 = vmatprep.mubr.f32.mxu0 %v287
        %1005 = vmatmul.mubr.f32.gmra.mrb[0].mxu0 %v254
        %v1006 = vpop.f32.mrb[0].mxu0
        %v1007 = vadd.f32 %v782, %v1006
        %v1008 = vpop.f32.mrb[0].mxu0
        %1009 = vmatprep.mubr.f32.mxu0 %v288
        %1010 = vmatmul.mubr.f32.gmra.mrb[0].mxu0 %v255
        %v1011 = vpop.f32.mrb[0].mxu0
        %v1012 = vadd.f32 %v787, %v1011
        %v1013 = vpop.f32.mrb[0].mxu0
        %1014 = vmatprep.mubr.f32.mxu0 %v289
        %1015 = vmatmul.mubr.f32.gmra.mrb[0].mxu0 %v256
        %v1016 = vpop.f32.mrb[0].mxu0
        %v1017 = vadd.f32 %v792, %v1016
        %v1018 = vpop.f32.mrb[0].mxu0
        %1019 = vmatprep.mubr.f32.mxu0 %v290
        %1020 = vmatmul.mubr.f32.gmra.mrb[0].mxu0 %v257
        %v1021 = vpop.f32.mrb[0].mxu0
        %v1022 = vadd.f32 %v797, %v1021
        %v1023 = vpop.f32.mrb[0].mxu0
        %1024 = vmatprep.mubr.f32.mxu0 %v291
        %1025 = vmatmul.mubr.f32.gmra.mrb[0].mxu0 %v258
        %v1026 = vpop.f32.mrb[0].mxu0
        %v1027 = vadd.f32 %v802, %v1026
        %v1028 = vpop.f32.mrb[0].mxu0
        %1029 = vmatprep.mubr.f32.mxu0 %v292
        %1030 = vmatmul.mubr.f32.gmra.mrb[0].mxu0 %v259
        %v1031 = vpop.f32.mrb[0].mxu0
        %v1032 = vadd.f32 %v807, %v1031
        %v1033 = vpop.f32.mrb[0].mxu0
        %1034 = vmatprep.mubr.f32.mxu0 %v293
        %1035 = vmatmul.mubr.f32.gmra.mrb[0].mxu0 %v260
        %v1036 = vpop.f32.mrb[0].mxu0
        %v1037 = vadd.f32 %v812, %v1036
        %v1038 = vpop.f32.mrb[0].mxu0
        %1039 = vmatprep.mubr.f32.mxu0 %v294
        %1040 = vmatmul.mubr.f32.gmra.mrb[0].mxu0 %v261
        %v1041 = vpop.f32.mrb[0].mxu0
        %v1042 = vadd.f32 %v817, %v1041
        %v1043 = vpop.f32.mrb[0].mxu0
        %1044 = vmatprep.mubr.f32.mxu0 %v295
        %1045 = vmatmul.mubr.f32.gmra.mrb[0].mxu0 %v262
        %v1046 = vpop.f32.mrb[0].mxu0
        %v1047 = vadd.f32 %v822, %v1046
        %v1048 = vpop.f32.mrb[0].mxu0
        %1049 = vmatprep.mubr.f32.mxu0 %v296
        %1050 = vmatmul.mubr.f32.gmra.mrb[0].mxu0 %v263
        %v1051 = vpop.f32.mrb[0].mxu0
        %v1052 = vadd.f32 %v827, %v1051
        %v1053 = vpop.f32.mrb[0].mxu0
        %1054 = vmatprep.mubr.f32.mxu0 %v297
        %1055 = vmatmul.mubr.f32.gmra.mrb[0].mxu0 %v264
        %v1056 = vpop.f32.mrb[0].mxu0
        %v1057 = vadd.f32 %v832, %v1056
        %v1058 = vpop.f32.mrb[0].mxu0
        %1059 = vdwg.mxu0
        %1060 = vmatprep.subr.mxu0 0.0
        %1061 = vmatpush1.msra.mxu0 %v523
        %1062 = vmatprep.subr.mxu0 0.0
        %1063 = vmatpush1.msra.mxu0 %v524
        %1064 = vmatprep.subr.mxu0 0.0
        %1065 = vmatpush1.msra.mxu0 %v525
        %1066 = vmatprep.subr.mxu0 0.0
        %1067 = vmatpush1.msra.mxu0 %v526
        %1068 = vmatprep.subr.mxu0 0.0
        %1069 = vmatpush1.msra.mxu0 %v527
        %1070 = vmatprep.subr.mxu0 0.0
        %1071 = vmatpush1.msra.mxu0 %v528
        %1072 = vmatprep.subr.mxu0 0.0
        %1073 = vmatpush1.msra.mxu0 %v529
        %1074 = vmatprep.subr.mxu0 0.0
        %1075 = vmatpush1.msra.mxu0 %v530
        %1076 = vmatprep.subr.mxu0 0.0
        %1077 = vmatpush1.msra.mxu0 %v531
        %1078 = vmatprep.subr.mxu0 0.0
        %1079 = vmatpush1.msra.mxu0 %v532
        %1080 = vmatprep.subr.mxu0 0.0
        %1081 = vmatpush1.msra.mxu0 %v533
        %1082 = vmatprep.subr.mxu0 0.0
        %1083 = vmatpush1.msra.mxu0 %v534
        %1084 = vmatprep.subr.mxu0 0.0
        %1085 = vmatpush1.msra.mxu0 %v535
        %1086 = vmatprep.subr.mxu0 0.0
        %1087 = vmatpush1.msra.mxu0 %v536
        %1088 = vmatprep.subr.mxu0 0.0
        %1089 = vmatpush1.msra.mxu0 %v537
        %1090 = vmatprep.subr.mxu0 0.0
        %1091 = vmatpush1.msra.mxu0 %v538
        %1092 = vmatprep.subr.mxu0 0.0
        %1093 = vmatpush1.msra.mxu0 %v539
        %1094 = vmatprep.subr.mxu0 0.0
        %1095 = vmatpush1.msra.mxu0 %v540
        %1096 = vmatprep.subr.mxu0 0.0
        %1097 = vmatpush1.msra.mxu0 %v541
        %1098 = vmatprep.subr.mxu0 0.0
        %1099 = vmatpush1.msra.mxu0 %v542
        %1100 = vmatprep.subr.mxu0 0.0
        %1101 = vmatpush1.msra.mxu0 %v543
        %1102 = vmatprep.subr.mxu0 0.0
        %1103 = vmatpush1.msra.mxu0 %v544
        %1104 = vmatprep.subr.mxu0 0.0
        %1105 = vmatpush1.msra.mxu0 %v545
        %1106 = vmatprep.subr.mxu0 0.0
        %1107 = vmatpush1.msra.mxu0 %v546
        %1108 = vmatprep.subr.mxu0 0.0
        %1109 = vmatpush1.msra.mxu0 %v547
        %1110 = vmatprep.subr.mxu0 0.0
        %1111 = vmatpush1.msra.mxu0 %v548
        %1112 = vmatprep.subr.mxu0 0.0
        %1113 = vmatpush1.msra.mxu0 %v549
        %1114 = vmatprep.subr.mxu0 0.0
        %1115 = vmatpush1.msra.mxu0 %v550
        %1116 = vmatprep.subr.mxu0 0.0
        %1117 = vmatpush1.msra.mxu0 %v551
        %1118 = vmatprep.subr.mxu0 0.0
        %1119 = vmatpush1.msra.mxu0 %v552
        %1120 = vmatprep.subr.mxu0 0.0
        %1121 = vmatpush1.msra.mxu0 %v553
        %1122 = vmatprep.subr.mxu0 0.0
        %1123 = vmatpush1.msra.mxu0 %v554
        %1124 = vmatprep.mubr.f32.mxu0 %v330
        %1125 = vmatmul.mubr.f32.gmra.mrb[0].mxu0 %v298
        %v1126 = vpop.f32.mrb[0].mxu0
        %v1127 = vadd.f32 %v902, %v1126
        %v1128 = vpop.f32.mrb[0].mxu0
        %1129 = vmatprep.mubr.f32.mxu0 %v331
        %1130 = vmatmul.mubr.f32.gmra.mrb[0].mxu0 %v299
        %v1131 = vpop.f32.mrb[0].mxu0
        %v1132 = vadd.f32 %v907, %v1131
        %v1133 = vpop.f32.mrb[0].mxu0
        %1134 = vmatprep.mubr.f32.mxu0 %v332
        %1135 = vmatmul.mubr.f32.gmra.mrb[0].mxu0 %v300
        %v1136 = vpop.f32.mrb[0].mxu0
        %v1137 = vadd.f32 %v912, %v1136
        %v1138 = vpop.f32.mrb[0].mxu0
        %1139 = vmatprep.mubr.f32.mxu0 %v333
        %1140 = vmatmul.mubr.f32.gmra.mrb[0].mxu0 %v301
        %v1141 = vpop.f32.mrb[0].mxu0
        %v1142 = vadd.f32 %v917, %v1141
        %v1143 = vpop.f32.mrb[0].mxu0
        %1144 = vmatprep.mubr.f32.mxu0 %v334
        %1145 = vmatmul.mubr.f32.gmra.mrb[0].mxu0 %v302
        %v1146 = vpop.f32.mrb[0].mxu0
        %v1147 = vadd.f32 %v922, %v1146
        %v1148 = vpop.f32.mrb[0].mxu0
        %1149 = vmatprep.mubr.f32.mxu0 %v335
        %1150 = vmatmul.mubr.f32.gmra.mrb[0].mxu0 %v303
        %v1151 = vpop.f32.mrb[0].mxu0
        %v1152 = vadd.f32 %v927, %v1151
        %v1153 = vpop.f32.mrb[0].mxu0
        %1154 = vmatprep.mubr.f32.mxu0 %v336
        %1155 = vmatmul.mubr.f32.gmra.mrb[0].mxu0 %v304
        %v1156 = vpop.f32.mrb[0].mxu0
        %v1157 = vadd.f32 %v932, %v1156
        %v1158 = vpop.f32.mrb[0].mxu0
        %1159 = vmatprep.mubr.f32.mxu0 %v337
        %1160 = vmatmul.mubr.f32.gmra.mrb[0].mxu0 %v305
        %v1161 = vpop.f32.mrb[0].mxu0
        %v1162 = vadd.f32 %v937, %v1161
        %v1163 = vpop.f32.mrb[0].mxu0
        %1164 = vmatprep.mubr.f32.mxu0 %v338
        %1165 = vmatmul.mubr.f32.gmra.mrb[0].mxu0 %v306
        %v1166 = vpop.f32.mrb[0].mxu0
        %v1167 = vadd.f32 %v942, %v1166
        %v1168 = vpop.f32.mrb[0].mxu0
        %1169 = vmatprep.mubr.f32.mxu0 %v339
        %1170 = vmatmul.mubr.f32.gmra.mrb[0].mxu0 %v307
        %v1171 = vpop.f32.mrb[0].mxu0
        %v1172 = vadd.f32 %v947, %v1171
        %v1173 = vpop.f32.mrb[0].mxu0
        %1174 = vmatprep.mubr.f32.mxu0 %v340
        %1175 = vmatmul.mubr.f32.gmra.mrb[0].mxu0 %v308
        %v1176 = vpop.f32.mrb[0].mxu0
        %v1177 = vadd.f32 %v952, %v1176
        %v1178 = vpop.f32.mrb[0].mxu0
        %1179 = vmatprep.mubr.f32.mxu0 %v341
        %1180 = vmatmul.mubr.f32.gmra.mrb[0].mxu0 %v309
        %v1181 = vpop.f32.mrb[0].mxu0
        %v1182 = vadd.f32 %v957, %v1181
        %v1183 = vpop.f32.mrb[0].mxu0
        %1184 = vmatprep.mubr.f32.mxu0 %v342
        %1185 = vmatmul.mubr.f32.gmra.mrb[0].mxu0 %v310
        %v1186 = vpop.f32.mrb[0].mxu0
        %v1187 = vadd.f32 %v962, %v1186
        %v1188 = vpop.f32.mrb[0].mxu0
        %1189 = vmatprep.mubr.f32.mxu0 %v343
        %1190 = vmatmul.mubr.f32.gmra.mrb[0].mxu0 %v311
        %v1191 = vpop.f32.mrb[0].mxu0
        %v1192 = vadd.f32 %v967, %v1191
        %v1193 = vpop.f32.mrb[0].mxu0
        %1194 = vmatprep.mubr.f32.mxu0 %v344
        %1195 = vmatmul.mubr.f32.gmra.mrb[0].mxu0 %v312
        %v1196 = vpop.f32.mrb[0].mxu0
        %v1197 = vadd.f32 %v972, %v1196
        %v1198 = vpop.f32.mrb[0].mxu0
        %1199 = vmatprep.mubr.f32.mxu0 %v345
        %1200 = vmatmul.mubr.f32.gmra.mrb[0].mxu0 %v313
        %v1201 = vpop.f32.mrb[0].mxu0
        %v1202 = vadd.f32 %v977, %v1201
        %v1203 = vpop.f32.mrb[0].mxu0
        %1204 = vmatprep.mubr.f32.mxu0 %v346
        %1205 = vmatmul.mubr.f32.gmra.mrb[0].mxu0 %v314
        %v1206 = vpop.f32.mrb[0].mxu0
        %v1207 = vadd.f32 %v982, %v1206
        %v1208 = vpop.f32.mrb[0].mxu0
        %1209 = vmatprep.mubr.f32.mxu0 %v347
        %1210 = vmatmul.mubr.f32.gmra.mrb[0].mxu0 %v315
        %v1211 = vpop.f32.mrb[0].mxu0
        %v1212 = vadd.f32 %v987, %v1211
        %v1213 = vpop.f32.mrb[0].mxu0
        %1214 = vmatprep.mubr.f32.mxu0 %v348
        %1215 = vmatmul.mubr.f32.gmra.mrb[0].mxu0 %v316
        %v1216 = vpop.f32.mrb[0].mxu0
        %v1217 = vadd.f32 %v992, %v1216
        %v1218 = vpop.f32.mrb[0].mxu0
        %1219 = vmatprep.mubr.f32.mxu0 %v349
        %1220 = vmatmul.mubr.f32.gmra.mrb[0].mxu0 %v317
        %v1221 = vpop.f32.mrb[0].mxu0
        %v1222 = vadd.f32 %v997, %v1221
        %v1223 = vpop.f32.mrb[0].mxu0
        %1224 = vmatprep.mubr.f32.mxu0 %v350
        %1225 = vmatmul.mubr.f32.gmra.mrb[0].mxu0 %v318
        %v1226 = vpop.f32.mrb[0].mxu0
        %v1227 = vadd.f32 %v1002, %v1226
        %v1228 = vpop.f32.mrb[0].mxu0
        %1229 = vmatprep.mubr.f32.mxu0 %v351
        %1230 = vmatmul.mubr.f32.gmra.mrb[0].mxu0 %v319
        %v1231 = vpop.f32.mrb[0].mxu0
        %v1232 = vadd.f32 %v1007, %v1231
        %v1233 = vpop.f32.mrb[0].mxu0
        %1234 = vmatprep.mubr.f32.mxu0 %v352
        %1235 = vmatmul.mubr.f32.gmra.mrb[0].mxu0 %v320
        %v1236 = vpop.f32.mrb[0].mxu0
        %v1237 = vadd.f32 %v1012, %v1236
        %v1238 = vpop.f32.mrb[0].mxu0
        %1239 = vmatprep.mubr.f32.mxu0 %v353
        %1240 = vmatmul.mubr.f32.gmra.mrb[0].mxu0 %v321
        %v1241 = vpop.f32.mrb[0].mxu0
        %v1242 = vadd.f32 %v1017, %v1241
        %v1243 = vpop.f32.mrb[0].mxu0
        %1244 = vmatprep.mubr.f32.mxu0 %v354
        %1245 = vmatmul.mubr.f32.gmra.mrb[0].mxu0 %v322
        %v1246 = vpop.f32.mrb[0].mxu0
        %v1247 = vadd.f32 %v1022, %v1246
        %v1248 = vpop.f32.mrb[0].mxu0
        %1249 = vmatprep.mubr.f32.mxu0 %v355
        %1250 = vmatmul.mubr.f32.gmra.mrb[0].mxu0 %v323
        %v1251 = vpop.f32.mrb[0].mxu0
        %v1252 = vadd.f32 %v1027, %v1251
        %v1253 = vpop.f32.mrb[0].mxu0
        %1254 = vmatprep.mubr.f32.mxu0 %v356
        %1255 = vmatmul.mubr.f32.gmra.mrb[0].mxu0 %v324
        %v1256 = vpop.f32.mrb[0].mxu0
        %v1257 = vadd.f32 %v1032, %v1256
        %v1258 = vpop.f32.mrb[0].mxu0
        %1259 = vmatprep.mubr.f32.mxu0 %v357
        %1260 = vmatmul.mubr.f32.gmra.mrb[0].mxu0 %v325
        %v1261 = vpop.f32.mrb[0].mxu0
        %v1262 = vadd.f32 %v1037, %v1261
        %v1263 = vpop.f32.mrb[0].mxu0
        %1264 = vmatprep.mubr.f32.mxu0 %v358
        %1265 = vmatmul.mubr.f32.gmra.mrb[0].mxu0 %v326
        %v1266 = vpop.f32.mrb[0].mxu0
        %v1267 = vadd.f32 %v1042, %v1266
        %v1268 = vpop.f32.mrb[0].mxu0
        %1269 = vmatprep.mubr.f32.mxu0 %v359
        %1270 = vmatmul.mubr.f32.gmra.mrb[0].mxu0 %v327
        %v1271 = vpop.f32.mrb[0].mxu0
        %v1272 = vadd.f32 %v1047, %v1271
        %v1273 = vpop.f32.mrb[0].mxu0
        %1274 = vmatprep.mubr.f32.mxu0 %v360
        %1275 = vmatmul.mubr.f32.gmra.mrb[0].mxu0 %v328
        %v1276 = vpop.f32.mrb[0].mxu0
        %v1277 = vadd.f32 %v1052, %v1276
        %v1278 = vpop.f32.mrb[0].mxu0
        %1279 = vmatprep.mubr.f32.mxu0 %v361
        %1280 = vmatmul.mubr.f32.gmra.mrb[0].mxu0 %v329
        %v1281 = vpop.f32.mrb[0].mxu0
        %v1282 = vadd.f32 %v1057, %v1281
        %v1283 = vpop.f32.mrb[0].mxu0
        %1284 = vdwg.mxu0
        %1285 = vmatprep.subr.mxu0 0.0
        %1286 = vmatpush1.msra.mxu0 %v555
        %1287 = vmatprep.subr.mxu0 0.0
        %1288 = vmatpush1.msra.mxu0 %v556
        %1289 = vmatprep.subr.mxu0 0.0
        %1290 = vmatpush1.msra.mxu0 %v557
        %1291 = vmatprep.subr.mxu0 0.0
        %1292 = vmatpush1.msra.mxu0 %v558
        %1293 = vmatprep.subr.mxu0 0.0
        %1294 = vmatpush1.msra.mxu0 %v559
        %1295 = vmatprep.subr.mxu0 0.0
        %1296 = vmatpush1.msra.mxu0 %v560
        %1297 = vmatprep.subr.mxu0 0.0
        %1298 = vmatpush1.msra.mxu0 %v561
        %1299 = vmatprep.subr.mxu0 0.0
        %1300 = vmatpush1.msra.mxu0 %v562
        %1301 = vmatprep.subr.mxu0 0.0
        %1302 = vmatpush1.msra.mxu0 %v563
        %1303 = vmatprep.subr.mxu0 0.0
        %1304 = vmatpush1.msra.mxu0 %v564
        %1305 = vmatprep.subr.mxu0 0.0
        %1306 = vmatpush1.msra.mxu0 %v565
        %1307 = vmatprep.subr.mxu0 0.0
        %1308 = vmatpush1.msra.mxu0 %v566
        %1309 = vmatprep.subr.mxu0 0.0
        %1310 = vmatpush1.msra.mxu0 %v567
        %1311 = vmatprep.subr.mxu0 0.0
        %1312 = vmatpush1.msra.mxu0 %v568
        %1313 = vmatprep.subr.mxu0 0.0
        %1314 = vmatpush1.msra.mxu0 %v569
        %1315 = vmatprep.subr.mxu0 0.0
        %1316 = vmatpush1.msra.mxu0 %v570
        %1317 = vmatprep.subr.mxu0 0.0
        %1318 = vmatpush1.msra.mxu0 %v571
        %1319 = vmatprep.subr.mxu0 0.0
        %1320 = vmatpush1.msra.mxu0 %v572
        %1321 = vmatprep.subr.mxu0 0.0
        %1322 = vmatpush1.msra.mxu0 %v573
        %1323 = vmatprep.subr.mxu0 0.0
        %1324 = vmatpush1.msra.mxu0 %v574
        %1325 = vmatprep.subr.mxu0 0.0
        %1326 = vmatpush1.msra.mxu0 %v575
        %1327 = vmatprep.subr.mxu0 0.0
        %1328 = vmatpush1.msra.mxu0 %v576
        %1329 = vmatprep.subr.mxu0 0.0
        %1330 = vmatpush1.msra.mxu0 %v577
        %1331 = vmatprep.subr.mxu0 0.0
        %1332 = vmatpush1.msra.mxu0 %v578
        %1333 = vmatprep.subr.mxu0 0.0
        %1334 = vmatpush1.msra.mxu0 %v579
        %1335 = vmatprep.subr.mxu0 0.0
        %1336 = vmatpush1.msra.mxu0 %v580
        %1337 = vmatprep.subr.mxu0 0.0
        %1338 = vmatpush1.msra.mxu0 %v581
        %1339 = vmatprep.subr.mxu0 0.0
        %1340 = vmatpush1.msra.mxu0 %v582
        %1341 = vmatprep.subr.mxu0 0.0
        %1342 = vmatpush1.msra.mxu0 %v583
        %1343 = vmatprep.subr.mxu0 0.0
        %1344 = vmatpush1.msra.mxu0 %v584
        %1345 = vmatprep.subr.mxu0 0.0
        %1346 = vmatpush1.msra.mxu0 %v585
        %1347 = vmatprep.subr.mxu0 0.0
        %1348 = vmatpush1.msra.mxu0 %v586
        %1349 = vmatprep.mubr.f32.mxu0 %v395
        %1350 = vmatmul.mubr.f32.gmra.mrb[0].mxu0 %v363
        %v1351 = vpop.f32.mrb[0].mxu0
        %v1352 = vadd.f32 %v1127, %v1351
        %v1353 = vpop.f32.mrb[0].mxu0
        %1354 = vmatprep.mubr.f32.mxu0 %v396
        %1355 = vmatmul.mubr.f32.gmra.mrb[0].mxu0 %v364
        %v1356 = vpop.f32.mrb[0].mxu0
        %v1357 = vadd.f32 %v1132, %v1356
        %v1358 = vpop.f32.mrb[0].mxu0
        %1359 = vmatprep.mubr.f32.mxu0 %v397
        %1360 = vmatmul.mubr.f32.gmra.mrb[0].mxu0 %v365
        %v1361 = vpop.f32.mrb[0].mxu0
        %v1362 = vadd.f32 %v1137, %v1361
        %v1363 = vpop.f32.mrb[0].mxu0
        %1364 = vmatprep.mubr.f32.mxu0 %v398
        %1365 = vmatmul.mubr.f32.gmra.mrb[0].mxu0 %v366
        %v1366 = vpop.f32.mrb[0].mxu0
        %v1367 = vadd.f32 %v1142, %v1366
        %v1368 = vpop.f32.mrb[0].mxu0
        %1369 = vmatprep.mubr.f32.mxu0 %v399
        %1370 = vmatmul.mubr.f32.gmra.mrb[0].mxu0 %v367
        %v1371 = vpop.f32.mrb[0].mxu0
        %v1372 = vadd.f32 %v1147, %v1371
        %v1373 = vpop.f32.mrb[0].mxu0
        %1374 = vmatprep.mubr.f32.mxu0 %v400
        %1375 = vmatmul.mubr.f32.gmra.mrb[0].mxu0 %v368
        %v1376 = vpop.f32.mrb[0].mxu0
        %v1377 = vadd.f32 %v1152, %v1376
        %v1378 = vpop.f32.mrb[0].mxu0
        %1379 = vmatprep.mubr.f32.mxu0 %v401
        %1380 = vmatmul.mubr.f32.gmra.mrb[0].mxu0 %v369
        %v1381 = vpop.f32.mrb[0].mxu0
        %v1382 = vadd.f32 %v1157, %v1381
        %v1383 = vpop.f32.mrb[0].mxu0
        %1384 = vmatprep.mubr.f32.mxu0 %v402
        %1385 = vmatmul.mubr.f32.gmra.mrb[0].mxu0 %v370
        %v1386 = vpop.f32.mrb[0].mxu0
        %v1387 = vadd.f32 %v1162, %v1386
        %v1388 = vpop.f32.mrb[0].mxu0
        %1389 = vmatprep.mubr.f32.mxu0 %v403
        %1390 = vmatmul.mubr.f32.gmra.mrb[0].mxu0 %v371
        %v1391 = vpop.f32.mrb[0].mxu0
        %v1392 = vadd.f32 %v1167, %v1391
        %v1393 = vpop.f32.mrb[0].mxu0
        %1394 = vmatprep.mubr.f32.mxu0 %v404
        %1395 = vmatmul.mubr.f32.gmra.mrb[0].mxu0 %v372
        %v1396 = vpop.f32.mrb[0].mxu0
        %v1397 = vadd.f32 %v1172, %v1396
        %v1398 = vpop.f32.mrb[0].mxu0
        %1399 = vmatprep.mubr.f32.mxu0 %v405
        %1400 = vmatmul.mubr.f32.gmra.mrb[0].mxu0 %v373
        %v1401 = vpop.f32.mrb[0].mxu0
        %v1402 = vadd.f32 %v1177, %v1401
        %v1403 = vpop.f32.mrb[0].mxu0
        %1404 = vmatprep.mubr.f32.mxu0 %v406
        %1405 = vmatmul.mubr.f32.gmra.mrb[0].mxu0 %v374
        %v1406 = vpop.f32.mrb[0].mxu0
        %v1407 = vadd.f32 %v1182, %v1406
        %v1408 = vpop.f32.mrb[0].mxu0
        %1409 = vmatprep.mubr.f32.mxu0 %v407
        %1410 = vmatmul.mubr.f32.gmra.mrb[0].mxu0 %v375
        %v1411 = vpop.f32.mrb[0].mxu0
        %v1412 = vadd.f32 %v1187, %v1411
        %v1413 = vpop.f32.mrb[0].mxu0
        %1414 = vmatprep.mubr.f32.mxu0 %v408
        %1415 = vmatmul.mubr.f32.gmra.mrb[0].mxu0 %v376
        %v1416 = vpop.f32.mrb[0].mxu0
        %v1417 = vadd.f32 %v1192, %v1416
        %v1418 = vpop.f32.mrb[0].mxu0
        %1419 = vmatprep.mubr.f32.mxu0 %v409
        %1420 = vmatmul.mubr.f32.gmra.mrb[0].mxu0 %v377
        %v1421 = vpop.f32.mrb[0].mxu0
        %v1422 = vadd.f32 %v1197, %v1421
        %v1423 = vpop.f32.mrb[0].mxu0
        %1424 = vmatprep.mubr.f32.mxu0 %v410
        %1425 = vmatmul.mubr.f32.gmra.mrb[0].mxu0 %v378
        %v1426 = vpop.f32.mrb[0].mxu0
        %v1427 = vadd.f32 %v1202, %v1426
        %v1428 = vpop.f32.mrb[0].mxu0
        %1429 = vmatprep.mubr.f32.mxu0 %v411
        %1430 = vmatmul.mubr.f32.gmra.mrb[0].mxu0 %v379
        %v1431 = vpop.f32.mrb[0].mxu0
        %v1432 = vadd.f32 %v1207, %v1431
        %v1433 = vpop.f32.mrb[0].mxu0
        %1434 = vmatprep.mubr.f32.mxu0 %v412
        %1435 = vmatmul.mubr.f32.gmra.mrb[0].mxu0 %v380
        %v1436 = vpop.f32.mrb[0].mxu0
        %v1437 = vadd.f32 %v1212, %v1436
        %v1438 = vpop.f32.mrb[0].mxu0
        %1439 = vmatprep.mubr.f32.mxu0 %v413
        %1440 = vmatmul.mubr.f32.gmra.mrb[0].mxu0 %v381
        %v1441 = vpop.f32.mrb[0].mxu0
        %v1442 = vadd.f32 %v1217, %v1441
        %v1443 = vpop.f32.mrb[0].mxu0
        %1444 = vmatprep.mubr.f32.mxu0 %v414
        %1445 = vmatmul.mubr.f32.gmra.mrb[0].mxu0 %v382
        %v1446 = vpop.f32.mrb[0].mxu0
        %v1447 = vadd.f32 %v1222, %v1446
        %v1448 = vpop.f32.mrb[0].mxu0
        %1449 = vmatprep.mubr.f32.mxu0 %v415
        %1450 = vmatmul.mubr.f32.gmra.mrb[0].mxu0 %v383
        %v1451 = vpop.f32.mrb[0].mxu0
        %v1452 = vadd.f32 %v1227, %v1451
        %v1453 = vpop.f32.mrb[0].mxu0
        %1454 = vmatprep.mubr.f32.mxu0 %v416
        %1455 = vmatmul.mubr.f32.gmra.mrb[0].mxu0 %v384
        %v1456 = vpop.f32.mrb[0].mxu0
        %v1457 = vadd.f32 %v1232, %v1456
        %v1458 = vpop.f32.mrb[0].mxu0
        %1459 = vmatprep.mubr.f32.mxu0 %v417
        %1460 = vmatmul.mubr.f32.gmra.mrb[0].mxu0 %v385
        %v1461 = vpop.f32.mrb[0].mxu0
        %v1462 = vadd.f32 %v1237, %v1461
        %v1463 = vpop.f32.mrb[0].mxu0
        %1464 = vmatprep.mubr.f32.mxu0 %v418
        %1465 = vmatmul.mubr.f32.gmra.mrb[0].mxu0 %v386
        %v1466 = vpop.f32.mrb[0].mxu0
        %v1467 = vadd.f32 %v1242, %v1466
        %v1468 = vpop.f32.mrb[0].mxu0
        %1469 = vmatprep.mubr.f32.mxu0 %v419
        %1470 = vmatmul.mubr.f32.gmra.mrb[0].mxu0 %v387
        %v1471 = vpop.f32.mrb[0].mxu0
        %v1472 = vadd.f32 %v1247, %v1471
        %v1473 = vpop.f32.mrb[0].mxu0
        %1474 = vmatprep.mubr.f32.mxu0 %v420
        %1475 = vmatmul.mubr.f32.gmra.mrb[0].mxu0 %v388
        %v1476 = vpop.f32.mrb[0].mxu0
        %v1477 = vadd.f32 %v1252, %v1476
        %v1478 = vpop.f32.mrb[0].mxu0
        %1479 = vmatprep.mubr.f32.mxu0 %v421
        %1480 = vmatmul.mubr.f32.gmra.mrb[0].mxu0 %v389
        %v1481 = vpop.f32.mrb[0].mxu0
        %v1482 = vadd.f32 %v1257, %v1481
        %v1483 = vpop.f32.mrb[0].mxu0
        %1484 = vmatprep.mubr.f32.mxu0 %v422
        %1485 = vmatmul.mubr.f32.gmra.mrb[0].mxu0 %v390
        %v1486 = vpop.f32.mrb[0].mxu0
        %v1487 = vadd.f32 %v1262, %v1486
        %v1488 = vpop.f32.mrb[0].mxu0
        %1489 = vmatprep.mubr.f32.mxu0 %v423
        %1490 = vmatmul.mubr.f32.gmra.mrb[0].mxu0 %v391
        %v1491 = vpop.f32.mrb[0].mxu0
        %v1492 = vadd.f32 %v1267, %v1491
        %v1493 = vpop.f32.mrb[0].mxu0
        %1494 = vmatprep.mubr.f32.mxu0 %v424
        %1495 = vmatmul.mubr.f32.gmra.mrb[0].mxu0 %v392
        %v1496 = vpop.f32.mrb[0].mxu0
        %v1497 = vadd.f32 %v1272, %v1496
        %v1498 = vpop.f32.mrb[0].mxu0
        %1499 = vmatprep.mubr.f32.mxu0 %v425
        %1500 = vmatmul.mubr.f32.gmra.mrb[0].mxu0 %v393
        %v1501 = vpop.f32.mrb[0].mxu0
        %v1502 = vadd.f32 %v1277, %v1501
        %v1503 = vpop.f32.mrb[0].mxu0
        %1504 = vmatprep.mubr.f32.mxu0 %v426
        %1505 = vmatmul.mubr.f32.gmra.mrb[0].mxu0 %v394
        %v1506 = vpop.f32.mrb[0].mxu0
        %v1507 = vadd.f32 %v1282, %v1506
        %v1508 = vpop.f32.mrb[0].mxu0
        %1509 = vdwg.mxu0
        %1510 = vmatprep.subr.mxu0 0.0
        %1511 = vmatpush1.msra.mxu0 %v587
        %1512 = vmatprep.subr.mxu0 0.0
        %1513 = vmatpush1.msra.mxu0 %v588
        %1514 = vmatprep.subr.mxu0 0.0
        %1515 = vmatpush1.msra.mxu0 %v589
        %1516 = vmatprep.subr.mxu0 0.0
        %1517 = vmatpush1.msra.mxu0 %v590
        %1518 = vmatprep.subr.mxu0 0.0
        %1519 = vmatpush1.msra.mxu0 %v591
        %1520 = vmatprep.subr.mxu0 0.0
        %1521 = vmatpush1.msra.mxu0 %v592
        %1522 = vmatprep.subr.mxu0 0.0
        %1523 = vmatpush1.msra.mxu0 %v593
        %1524 = vmatprep.subr.mxu0 0.0
        %1525 = vmatpush1.msra.mxu0 %v594
        %1526 = vmatprep.subr.mxu0 0.0
        %1527 = vmatpush1.msra.mxu0 %v595
        %1528 = vmatprep.subr.mxu0 0.0
        %1529 = vmatpush1.msra.mxu0 %v596
        %1530 = vmatprep.subr.mxu0 0.0
        %1531 = vmatpush1.msra.mxu0 %v597
        %1532 = vmatprep.subr.mxu0 0.0
        %1533 = vmatpush1.msra.mxu0 %v598
        %1534 = vmatprep.subr.mxu0 0.0
        %1535 = vmatpush1.msra.mxu0 %v599
        %1536 = vmatprep.subr.mxu0 0.0
        %1537 = vmatpush1.msra.mxu0 %v600
        %1538 = vmatprep.subr.mxu0 0.0
        %1539 = vmatpush1.msra.mxu0 %v601
        %1540 = vmatprep.subr.mxu0 0.0
        %1541 = vmatpush1.msra.mxu0 %v602
        %1542 = vmatprep.subr.mxu0 0.0
        %1543 = vmatpush1.msra.mxu0 0.0
        %1544 = vmatprep.subr.mxu0 0.0
        %1545 = vmatpush1.msra.mxu0 0.0
        %1546 = vmatprep.subr.mxu0 0.0
        %1547 = vmatpush1.msra.mxu0 0.0
        %1548 = vmatprep.subr.mxu0 0.0
        %1549 = vmatpush1.msra.mxu0 0.0
        %1550 = vmatprep.subr.mxu0 0.0
        %1551 = vmatpush1.msra.mxu0 0.0
        %1552 = vmatprep.subr.mxu0 0.0
        %1553 = vmatpush1.msra.mxu0 0.0
        %1554 = vmatprep.subr.mxu0 0.0
        %1555 = vmatpush1.msra.mxu0 0.0
        %1556 = vmatprep.subr.mxu0 0.0
        %1557 = vmatpush1.msra.mxu0 0.0
        %1558 = vmatprep.subr.mxu0 0.0
        %1559 = vmatpush1.msra.mxu0 0.0
        %1560 = vmatprep.subr.mxu0 0.0
        %1561 = vmatpush1.msra.mxu0 0.0
        %1562 = vmatprep.subr.mxu0 0.0
        %1563 = vmatpush1.msra.mxu0 0.0
        %1564 = vmatprep.subr.mxu0 0.0
        %1565 = vmatpush1.msra.mxu0 0.0
        %1566 = vmatprep.subr.mxu0 0.0
        %1567 = vmatpush1.msra.mxu0 0.0
        %1568 = vmatprep.subr.mxu0 0.0
        %1569 = vmatpush1.msra.mxu0 0.0
        %1570 = vmatprep.subr.mxu0 0.0
        %1571 = vmatpush1.msra.mxu0 0.0
        %1572 = vmatprep.subr.mxu0 0.0
        %1573 = vmatpush1.msra.mxu0 0.0
        %1574 = vmatprep.mubr.f32.mxu0 0.0
        %1575 = vmatmul.mubr.f32.gmra.mrb[0].mxu0 %v427
        %v1576 = vpop.f32.mrb[0].mxu0
        %v1577 = vadd.f32 %v1352, %v1576
        %v1578 = vpop.f32.mrb[0].mxu0
        %1579 = vmatprep.mubr.f32.mxu0 0.0
        %1580 = vmatmul.mubr.f32.gmra.mrb[0].mxu0 %v428
        %v1581 = vpop.f32.mrb[0].mxu0
        %v1582 = vadd.f32 %v1357, %v1581
        %v1583 = vpop.f32.mrb[0].mxu0
        %1584 = vmatprep.mubr.f32.mxu0 0.0
        %1585 = vmatmul.mubr.f32.gmra.mrb[0].mxu0 %v429
        %v1586 = vpop.f32.mrb[0].mxu0
        %v1587 = vadd.f32 %v1362, %v1586
        %v1588 = vpop.f32.mrb[0].mxu0
        %1589 = vmatprep.mubr.f32.mxu0 0.0
        %1590 = vmatmul.mubr.f32.gmra.mrb[0].mxu0 %v430
        %v1591 = vpop.f32.mrb[0].mxu0
        %v1592 = vadd.f32 %v1367, %v1591
        %v1593 = vpop.f32.mrb[0].mxu0
        %1594 = vmatprep.mubr.f32.mxu0 0.0
        %1595 = vmatmul.mubr.f32.gmra.mrb[0].mxu0 %v431
        %v1596 = vpop.f32.mrb[0].mxu0
        %v1597 = vadd.f32 %v1372, %v1596
        %v1598 = vpop.f32.mrb[0].mxu0
        %1599 = vmatprep.mubr.f32.mxu0 0.0
        %1600 = vmatmul.mubr.f32.gmra.mrb[0].mxu0 %v432
        %v1601 = vpop.f32.mrb[0].mxu0
        %v1602 = vadd.f32 %v1377, %v1601
        %v1603 = vpop.f32.mrb[0].mxu0
        %1604 = vmatprep.mubr.f32.mxu0 0.0
        %1605 = vmatmul.mubr.f32.gmra.mrb[0].mxu0 %v433
        %v1606 = vpop.f32.mrb[0].mxu0
        %v1607 = vadd.f32 %v1382, %v1606
        %v1608 = vpop.f32.mrb[0].mxu0
        %1609 = vmatprep.mubr.f32.mxu0 0.0
        %1610 = vmatmul.mubr.f32.gmra.mrb[0].mxu0 %v434
        %v1611 = vpop.f32.mrb[0].mxu0
        %v1612 = vadd.f32 %v1387, %v1611
        %v1613 = vpop.f32.mrb[0].mxu0
        %1614 = vmatprep.mubr.f32.mxu0 0.0
        %1615 = vmatmul.mubr.f32.gmra.mrb[0].mxu0 %v435
        %v1616 = vpop.f32.mrb[0].mxu0
        %v1617 = vadd.f32 %v1392, %v1616
        %v1618 = vpop.f32.mrb[0].mxu0
        %1619 = vmatprep.mubr.f32.mxu0 0.0
        %1620 = vmatmul.mubr.f32.gmra.mrb[0].mxu0 %v436
        %v1621 = vpop.f32.mrb[0].mxu0
        %v1622 = vadd.f32 %v1397, %v1621
        %v1623 = vpop.f32.mrb[0].mxu0
        %1624 = vmatprep.mubr.f32.mxu0 0.0
        %1625 = vmatmul.mubr.f32.gmra.mrb[0].mxu0 %v437
        %v1626 = vpop.f32.mrb[0].mxu0
        %v1627 = vadd.f32 %v1402, %v1626
        %v1628 = vpop.f32.mrb[0].mxu0
        %1629 = vmatprep.mubr.f32.mxu0 0.0
        %1630 = vmatmul.mubr.f32.gmra.mrb[0].mxu0 %v438
        %v1631 = vpop.f32.mrb[0].mxu0
        %v1632 = vadd.f32 %v1407, %v1631
        %v1633 = vpop.f32.mrb[0].mxu0
        %1634 = vmatprep.mubr.f32.mxu0 0.0
        %1635 = vmatmul.mubr.f32.gmra.mrb[0].mxu0 %v439
        %v1636 = vpop.f32.mrb[0].mxu0
        %v1637 = vadd.f32 %v1412, %v1636
        %v1638 = vpop.f32.mrb[0].mxu0
        %1639 = vmatprep.mubr.f32.mxu0 0.0
        %1640 = vmatmul.mubr.f32.gmra.mrb[0].mxu0 %v440
        %v1641 = vpop.f32.mrb[0].mxu0
        %v1642 = vadd.f32 %v1417, %v1641
        %v1643 = vpop.f32.mrb[0].mxu0
        %1644 = vmatprep.mubr.f32.mxu0 0.0
        %1645 = vmatmul.mubr.f32.gmra.mrb[0].mxu0 %v441
        %v1646 = vpop.f32.mrb[0].mxu0
        %v1647 = vadd.f32 %v1422, %v1646
        %v1648 = vpop.f32.mrb[0].mxu0
        %1649 = vmatprep.mubr.f32.mxu0 0.0
        %1650 = vmatmul.mubr.f32.gmra.mrb[0].mxu0 %v442
        %v1651 = vpop.f32.mrb[0].mxu0
        %v1652 = vadd.f32 %v1427, %v1651
        %v1653 = vpop.f32.mrb[0].mxu0
        %1654 = vmatprep.mubr.f32.mxu0 0.0
        %1655 = vmatmul.mubr.f32.gmra.mrb[0].mxu0 %v443
        %v1656 = vpop.f32.mrb[0].mxu0
        %v1657 = vadd.f32 %v1432, %v1656
        %v1658 = vpop.f32.mrb[0].mxu0
        %1659 = vmatprep.mubr.f32.mxu0 0.0
        %1660 = vmatmul.mubr.f32.gmra.mrb[0].mxu0 %v444
        %v1661 = vpop.f32.mrb[0].mxu0
        %v1662 = vadd.f32 %v1437, %v1661
        %v1663 = vpop.f32.mrb[0].mxu0
        %1664 = vmatprep.mubr.f32.mxu0 0.0
        %1665 = vmatmul.mubr.f32.gmra.mrb[0].mxu0 %v445
        %v1666 = vpop.f32.mrb[0].mxu0
        %v1667 = vadd.f32 %v1442, %v1666
        %v1668 = vpop.f32.mrb[0].mxu0
        %1669 = vmatprep.mubr.f32.mxu0 0.0
        %1670 = vmatmul.mubr.f32.gmra.mrb[0].mxu0 %v446
        %v1671 = vpop.f32.mrb[0].mxu0
        %v1672 = vadd.f32 %v1447, %v1671
        %v1673 = vpop.f32.mrb[0].mxu0
        %1674 = vmatprep.mubr.f32.mxu0 0.0
        %1675 = vmatmul.mubr.f32.gmra.mrb[0].mxu0 %v447
        %v1676 = vpop.f32.mrb[0].mxu0
        %v1677 = vadd.f32 %v1452, %v1676
        %v1678 = vpop.f32.mrb[0].mxu0
        %1679 = vmatprep.mubr.f32.mxu0 0.0
        %1680 = vmatmul.mubr.f32.gmra.mrb[0].mxu0 %v448
        %v1681 = vpop.f32.mrb[0].mxu0
        %v1682 = vadd.f32 %v1457, %v1681
        %v1683 = vpop.f32.mrb[0].mxu0
        %1684 = vmatprep.mubr.f32.mxu0 0.0
        %1685 = vmatmul.mubr.f32.gmra.mrb[0].mxu0 %v449
        %v1686 = vpop.f32.mrb[0].mxu0
        %v1687 = vadd.f32 %v1462, %v1686
        %v1688 = vpop.f32.mrb[0].mxu0
        %1689 = vmatprep.mubr.f32.mxu0 0.0
        %1690 = vmatmul.mubr.f32.gmra.mrb[0].mxu0 %v450
        %v1691 = vpop.f32.mrb[0].mxu0
        %v1692 = vadd.f32 %v1467, %v1691
        %v1693 = vpop.f32.mrb[0].mxu0
        %1694 = vmatprep.mubr.f32.mxu0 0.0
        %1695 = vmatmul.mubr.f32.gmra.mrb[0].mxu0 %v451
        %v1696 = vpop.f32.mrb[0].mxu0
        %v1697 = vadd.f32 %v1472, %v1696
        %v1698 = vpop.f32.mrb[0].mxu0
        %1699 = vmatprep.mubr.f32.mxu0 0.0
        %1700 = vmatmul.mubr.f32.gmra.mrb[0].mxu0 %v452
        %v1701 = vpop.f32.mrb[0].mxu0
        %v1702 = vadd.f32 %v1477, %v1701
        %v1703 = vpop.f32.mrb[0].mxu0
        %1704 = vmatprep.mubr.f32.mxu0 0.0
        %1705 = vmatmul.mubr.f32.gmra.mrb[0].mxu0 %v453
        %v1706 = vpop.f32.mrb[0].mxu0
        %v1707 = vadd.f32 %v1482, %v1706
        %v1708 = vpop.f32.mrb[0].mxu0
        %1709 = vmatprep.mubr.f32.mxu0 0.0
        %1710 = vmatmul.mubr.f32.gmra.mrb[0].mxu0 %v454
        %v1711 = vpop.f32.mrb[0].mxu0
        %v1712 = vadd.f32 %v1487, %v1711
        %v1713 = vpop.f32.mrb[0].mxu0
        %1714 = vmatprep.mubr.f32.mxu0 0.0
        %1715 = vmatmul.mubr.f32.gmra.mrb[0].mxu0 %v455
        %v1716 = vpop.f32.mrb[0].mxu0
        %v1717 = vadd.f32 %v1492, %v1716
        %v1718 = vpop.f32.mrb[0].mxu0
        %1719 = vmatprep.mubr.f32.mxu0 0.0
        %1720 = vmatmul.mubr.f32.gmra.mrb[0].mxu0 %v456
        %v1721 = vpop.f32.mrb[0].mxu0
        %v1722 = vadd.f32 %v1497, %v1721
        %v1723 = vpop.f32.mrb[0].mxu0
        %1724 = vmatprep.mubr.f32.mxu0 0.0
        %1725 = vmatmul.mubr.f32.gmra.mrb[0].mxu0 %v457
        %v1726 = vpop.f32.mrb[0].mxu0
        %v1727 = vadd.f32 %v1502, %v1726
        %v1728 = vpop.f32.mrb[0].mxu0
        %1729 = vmatprep.mubr.f32.mxu0 0.0
        %1730 = vmatmul.mubr.f32.gmra.mrb[0].mxu0 %v458
        %v1731 = vpop.f32.mrb[0].mxu0
        %v1732 = vadd.f32 %v1507, %v1731
        %v1733 = vpop.f32.mrb[0].mxu0
        %1734 = vdwg.mxu0
        %v1735 = vmax.f32 %v1577, 0.0
        %v1736 = vmax.f32 %v1582, 0.0
        %v1737 = vmax.f32 %v1587, 0.0
        %v1738 = vmax.f32 %v1592, 0.0
        %v1739 = vmax.f32 %v1597, 0.0
        %v1740 = vmax.f32 %v1602, 0.0
        %v1741 = vmax.f32 %v1607, 0.0
        %v1742 = vmax.f32 %v1612, 0.0
        %v1743 = vmax.f32 %v1617, 0.0
        %v1744 = vmax.f32 %v1622, 0.0
        %v1745 = vmax.f32 %v1627, 0.0
        %v1746 = vmax.f32 %v1632, 0.0
        %v1747 = vmax.f32 %v1637, 0.0
        %v1748 = vmax.f32 %v1642, 0.0
        %v1749 = vmax.f32 %v1647, 0.0
        %v1750 = vmax.f32 %v1652, 0.0
        %v1751 = vmax.f32 %v1657, 0.0
        %v1752 = vmax.f32 %v1662, 0.0
        %v1753 = vmax.f32 %v1667, 0.0
        %v1754 = vmax.f32 %v1672, 0.0
        %v1755 = vmax.f32 %v1677, 0.0
        %v1756 = vmax.f32 %v1682, 0.0
        %v1757 = vmax.f32 %v1687, 0.0
        %v1758 = vmax.f32 %v1692, 0.0
        %v1759 = vmax.f32 %v1697, 0.0
        %v1760 = vmax.f32 %v1702, 0.0
        %v1761 = vmax.f32 %v1707, 0.0
        %v1762 = vmax.f32 %v1712, 0.0
        %v1763 = vmax.f32 %v1717, 0.0
        %v1764 = vmax.f32 %v1722, 0.0
        %v1765 = vmax.f32 %v1727, 0.0
        %v1766 = vmax.f32 %v1732, 0.0
        %1767 = vst [vmem:[%s163] sm:$0xff] %v1735
        %1768 = vst [vmem:[%s163 + $0x8] sm:$0xff] %v1736
        %1769 = vst [vmem:[%s163 + $0x10] sm:$0xff] %v1737
        %1770 = vst [vmem:[%s163 + $0x18] sm:$0xff] %v1738
        %1771 = vst [vmem:[%s163 + $0x20] sm:$0xff] %v1739
        %1772 = vst [vmem:[%s163 + $0x28] sm:$0xff] %v1740
        %1773 = vst [vmem:[%s163 + $0x30] sm:$0xff] %v1741
        %1774 = vst [vmem:[%s163 + $0x38] sm:$0xff] %v1742
        %1775 = vst [vmem:[%s163 + $0x40] sm:$0xff] %v1743
        %1776 = vst [vmem:[%s163 + $0x48] sm:$0xff] %v1744
        %1777 = vst [vmem:[%s163 + $0x50] sm:$0xff] %v1745
        %1778 = vst [vmem:[%s163 + $0x58] sm:$0xff] %v1746
        %1779 = vst [vmem:[%s163 + $0x60] sm:$0xff] %v1747
        %1780 = vst [vmem:[%s163 + $0x68] sm:$0xff] %v1748
        %1781 = vst [vmem:[%s163 + $0x70] sm:$0xff] %v1749
        %1782 = vst [vmem:[%s163 + $0x78] sm:$0xff] %v1750
        %1783 = vst [vmem:[%s163 + $0x80] sm:$0xff] %v1751
        %1784 = vst [vmem:[%s163 + $0x88] sm:$0xff] %v1752
        %1785 = vst [vmem:[%s163 + $0x90] sm:$0xff] %v1753
        %1786 = vst [vmem:[%s163 + $0x98] sm:$0xff] %v1754
        %1787 = vst [vmem:[%s163 + $0xa0] sm:$0xff] %v1755
        %1788 = vst [vmem:[%s163 + $0xa8] sm:$0xff] %v1756
        %1789 = vst [vmem:[%s163 + $0xb0] sm:$0xff] %v1757
        %1790 = vst [vmem:[%s163 + $0xb8] sm:$0xff] %v1758
        %1791 = vst [vmem:[%s163 + $0xc0] sm:$0xff] %v1759
        %1792 = vst [vmem:[%s163 + $0xc8] sm:$0xff] %v1760
        %1793 = vst [vmem:[%s163 + $0xd0] sm:$0xff] %v1761
        %1794 = vst [vmem:[%s163 + $0xd8] sm:$0xff] %v1762
        %1795 = vst [vmem:[%s163 + $0xe0] sm:$0xff] %v1763
        %1796 = vst [vmem:[%s163 + $0xe8] sm:$0xff] %v1764
        %1797 = vst [vmem:[%s163 + $0xf0] sm:$0xff] %v1765
        %1798 = vst [vmem:[%s163 + $0xf8] sm:$0xff] %v1766
        %s1799 = sand.u32 %s93, 1
        %s1800 = scalar_lea.sflag [#allocation3], %s1799
        %s1801 = sand.u32 %s93, 1
        %s1802 = smul.addr %s1801, 256
        %s1803 = scalar_lea.vmem [#allocation2], %s1802
        // Predicated region
        $region33: #{tpu_custom_call.1} parent=31 // pred_check
          %p1804 = pneg %p103
        $region34: #{tpu_custom_call.1} parent=31 // pred_check_branch
          %1806 = sbr.rel (%p1804) target = $region36
        $region35: #{tpu_custom_call.1} parent=31 // pred_region
          %s1808 = ssub.s32 4096, 4096
          %1809 = vsyncadd %s1800, %s1808
          %s1810 = smul.addr %s17, 32
          %s1811 = smul.addr %s1810, 128
          %s1812 = scalar_lea.hbm %s3, %s1811
          %s1813 = sshll.u32 %s1803, 4
          %s1814 = int_to_ptr.vmem [resolvable:$true] %s1813
          %1819 = dma.vmem_to_hbm [thread:$0]  %s1814, 4096, %s1812, %s1800, 128, 128, 8
        $region36: #{tpu_custom_call.1} parent=31 // pred_fallthru
          _
      $region32: #{tpu_custom_call.1} parent=5 // pred_fallthru
        _
      %p1820 = scmp.le.s32.totalorder 2, %s12
      // Predicated region
      $region37: #{tpu_custom_call.1} parent=5 // pred_check
        %p1821 = pneg %p1820
      $region38: #{tpu_custom_call.1} parent=5 // pred_check_branch
        %1823 = sbr.rel (%p1821) target = $region40
      $region39: #{tpu_custom_call.1} parent=5 // pred_region
        %s1824 = ssub.s32 %s12, 2
        // Predicated region
        $region41: #{tpu_custom_call.1} parent=39 // pred_check
          %p1825 = pneg %p109
        $region42: #{tpu_custom_call.1} parent=39 // pred_check_branch
          %1827 = sbr.rel (%p1825) target = $region44
        $region43: #{tpu_custom_call.1} parent=39 // pred_region
          %s1828 = sand.u32 %s94, 1
          %s1829 = scalar_lea.sflag [#allocation3], %s1828
          %s1830 = sand.u32 %s94, 1
          %s1831 = smul.addr %s1830, 256
          %s1832 = scalar_lea.vmem [#allocation2], %s1831
          %1833 = dma.done %s1829, 4096
        $region44: #{tpu_custom_call.1} parent=39 // pred_fallthru
          _
      $region40: #{tpu_custom_call.1} parent=5 // pred_fallthru
        _
    $region6: #{tpu_custom_call.1} parent=1 // loop_footer
      %s16 = sadd.s32 1, %s12
    $region7: #{tpu_custom_call.1} parent=1 // loop_footer_branch
      %11 = sbr.rel target = $region3
    $region8: #{tpu_custom_call.1} parent=1 // loop_exit
      _
    %1834 = vsyncpa [#allocation3], 1
    %s1835 = scalar_lea.sflag [#allocation3], 1
    %1836 = vsyncpa %s1835, 1

</llo_original>
